<compile_context>
chip_gen: v5e
topology: v5e:2x2
jax: 0.10.0
libtpu: 0.0.40
codegen_flags: <defaults>
</compile_context>

<pallas_src>
import functools

import jax
import jax.numpy as jnp
from jax.experimental import pallas as pl
from jax.experimental.pallas import tpu as pltpu

D2 = 512


# ---------------------------------------------------------------------------
# Production path (review item 1): plain JAX, no pallas_call.
# ---------------------------------------------------------------------------
def attention_layer(h_t, v):
    """Faithful AttentionLayer.forward output.

    nn.Softmax(dim=1) acts on a (v_len, 1) tensor, so a_t == 1.0 exactly and the
    context vector is the column-sum of v; h_t / w1 / w2 / beta cannot change it.
    Emitted as plain JAX so XLA fuses the tiny reduce into the decoder step.
    """
    del h_t
    return jnp.sum(v, axis=0, keepdims=True)


# ---------------------------------------------------------------------------
# One-time parameter prep (hoists transposes / casts out of the decode loop).
# ---------------------------------------------------------------------------
def prepare_attention_params(w1, w2, beta):
    """w1, w2: (D2, D2) nn.Linear weights; beta: (1, D2). Run once at load time."""
    return (
        w1.T.astype(jnp.bfloat16),   # rhs for h_t @ w1.T
        w2.T.astype(jnp.bfloat16),   # rhs for v   @ w2.T
        beta.astype(jnp.float32),    # (1, D2) lane-dense row
    )


# ---------------------------------------------------------------------------
# Pallas kernel: full score pipeline (faithful softmax over dim=1).
# ---------------------------------------------------------------------------
def _attention_kernel(h_ref, v_ref, w1t_ref, w2t_ref, beta_ref, o_ref,
                      hproj_ref, *, tanh_bf16):
    i = pl.program_id(0)

    @pl.when(i == 0)
    def _init():
        o_ref[...] = jnp.zeros_like(o_ref)
        # h projection computed once, kept resident across all v tiles.
        hproj_ref[...] = jnp.dot(
            h_ref[...].astype(jnp.bfloat16), w1t_ref[...],
            preferred_element_type=jnp.float32)

    v = v_ref[...]                                            # (tile, D2) f32
    v_proj = jnp.dot(v.astype(jnp.bfloat16), w2t_ref[...],
                     preferred_element_type=jnp.float32)      # (tile, D2), f32 acc
    pre = v_proj + hproj_ref[...]                             # VPU broadcast add
    if tanh_bf16:
        # v6e/v7x bf16 EUP path (~2x tanh throughput); upcast for the beta reduce.
        s = jnp.tanh(pre.astype(jnp.bfloat16)).astype(jnp.float32)
    else:
        s = jnp.tanh(pre)                                     # f32 EUP (v5e-safe)

    # beta(...) as VPU multiply + lane reduce (avoids an N=1 lane-padded MXU matmul).
    a = jnp.sum(s * beta_ref[...], axis=1, keepdims=True)     # (tile, 1)

    # Faithful nn.Softmax(dim=1) over the size-1 axis (identically 1.0 per row).
    e = jnp.exp(a - jnp.max(a, axis=1, keepdims=True))
    a_sm = e / jnp.sum(e, axis=1, keepdims=True)              # (tile, 1)

    # a_t.T @ v as broadcast multiply + sublane reduce; lane-dense (1, D2) output,
    # accumulated in the resident output block.
    o_ref[...] += jnp.sum(a_sm * v, axis=0, keepdims=True)


def attention_layer_pallas(h_t, v, w1t_bf16, w2t_bf16, beta_row, *,
                           tile_rows=512, tanh_bf16=False):
    """Faithful full-compute forward as one gridded Pallas call.

    Weights must come from prepare_attention_params (transpose/cast hoisted).
    Precision contract: bf16 inputs to the MXU, f32 accumulation, f32 tanh/softmax.
    """
    v_len, d = v.shape
    assert d == D2 and h_t.shape == (1, D2)

    if v_len <= tile_rows:
        tile = v_len                       # whole-array block (== full dims is legal)
        v_in = v
    else:
        tile = tile_rows
        pad = (-v_len) % tile
        # Zero rows are harmless: their softmax weight is 1.0 but the row is 0,
        # so they contribute nothing to the context sum.
        v_in = jnp.pad(v, ((0, pad), (0, 0))) if pad else v
    n_rows = v_in.shape[0]
    grid = n_rows // tile

    cost = pl.CostEstimate(
        flops=2 * (n_rows + 1) * D2 * D2,
        transcendentals=n_rows * D2 + n_rows,
        bytes_accessed=(2 * D2 * D2 * 2          # bf16 weights
                        + n_rows * D2 * 4        # v
                        + 2 * D2 * 4             # h_t + beta
                        + D2 * 4),               # output
    )

    kernel = functools.partial(_attention_kernel, tanh_bf16=tanh_bf16)

    return pl.pallas_call(
        kernel,
        out_shape=jax.ShapeDtypeStruct((1, D2), jnp.float32),
        grid_spec=pltpu.PrefetchScalarGridSpec(
            num_scalar_prefetch=0,
            grid=(grid,),
            in_specs=[
                pl.BlockSpec((1, D2), lambda i: (0, 0)),        # h_t   (resident)
                pl.BlockSpec((tile, D2), lambda i: (i, 0)),     # v tile (pipelined)
                pl.BlockSpec((D2, D2), lambda i: (0, 0)),       # w1.T  (resident)
                pl.BlockSpec((D2, D2), lambda i: (0, 0)),       # w2.T  (resident)
                pl.BlockSpec((1, D2), lambda i: (0, 0)),        # beta  (resident)
            ],
            out_specs=pl.BlockSpec((1, D2), lambda i: (0, 0)),  # resident accumulator
            scratch_shapes=[pltpu.VMEM((1, D2), jnp.float32)],  # h projection
        ),
        compiler_params=pltpu.CompilerParams(
            dimension_semantics=("arbitrary",)),                # reduction axis
        cost_estimate=cost,
    )(h_t, v_in, w1t_bf16, w2t_bf16, beta_row)


# ---------------------------------------------------------------------------
# Pure-JAX reference matching the PyTorch module exactly (f32 highest precision).
# ---------------------------------------------------------------------------
def attention_layer_ref(h_t, v, w1, w2, beta):
    p = jax.lax.Precision.HIGHEST
    a = jnp.tanh(jnp.dot(h_t, w1.T, precision=p) + jnp.dot(v, w2.T, precision=p))
    a = jnp.dot(a, beta.T, precision=p)           # (v_len, 1)
    a = jax.nn.softmax(a, axis=1)                 # softmax over the size-1 axis
    return jnp.dot(a.T, v, precision=p)           # (1, D2)


if __name__ == "__main__":
    key = jax.random.PRNGKey(0)
    k_h, k_v, k_w1, k_w2, k_b = jax.random.split(key, 5)

    v_len = 8  # small sequence length; D2 = 512 is fixed by the module

    h_t = jax.random.normal(k_h, (1, D2), dtype=jnp.float32)
    v = jax.random.normal(k_v, (v_len, D2), dtype=jnp.float32)

    # nn.Linear-like uniform(-1/sqrt(fan_in), 1/sqrt(fan_in)) init.
    bound = 1.0 / (D2 ** 0.5)
    w1 = jax.random.uniform(k_w1, (D2, D2), jnp.float32, -bound, bound)
    w2 = jax.random.uniform(k_w2, (D2, D2), jnp.float32, -bound, bound)
    beta = jax.random.uniform(k_b, (1, D2), jnp.float32, -bound, bound)

    ref = attention_layer_ref(h_t, v, w1, w2, beta)

    # Production fast path (plain JAX per review): exactly the module output.
    out_fast = jax.block_until_ready(attention_layer(h_t, v))
    assert out_fast.shape == (1, D2)
    assert jnp.allclose(out_fast, ref, atol=1e-4, rtol=1e-4), "fast path mismatch"

    # Pallas full-score-pipeline kernel (single-tile path).
    w1t, w2t, beta_row = prepare_attention_params(w1, w2, beta)
    out_pallas = jax.block_until_ready(
        attention_layer_pallas(h_t, v, w1t, w2t, beta_row))
    assert out_pallas.shape == (1, D2)
    assert jnp.allclose(out_pallas, ref, atol=1e-4, rtol=1e-4), "pallas path mismatch"

    # Gridded multi-tile path (v_len > tile_rows, non-multiple -> exercises padding).
    v_len_big = 1120
    v_big = jax.random.normal(k_v, (v_len_big, D2), dtype=jnp.float32)
    ref_big = attention_layer_ref(h_t, v_big, w1, w2, beta)
    out_big = jax.block_until_ready(
        attention_layer_pallas(h_t, v_big, w1t, w2t, beta_row, tile_rows=512))
    assert out_big.shape == (1, D2)
    assert jnp.allclose(out_big, ref_big, atol=1e-3, rtol=1e-4), "gridded path mismatch"

    print("KERNEL_OK")
</pallas_src>

<mosaic_0001>
module attributes {stable_mosaic.version = 11 : i64} {
  func.func @_attention_kernel(%arg0: i32, %arg1: memref<1x512xf32, #tpu.memory_space<vmem>>, %arg2: memref<8x512xf32, #tpu.memory_space<vmem>>, %arg3: memref<512x512xbf16, #tpu.memory_space<vmem>>, %arg4: memref<512x512xbf16, #tpu.memory_space<vmem>>, %arg5: memref<1x512xf32, #tpu.memory_space<vmem>>, %arg6: memref<1x512xf32, #tpu.memory_space<vmem>>, %arg7: memref<1x512xf32, #tpu.memory_space<vmem>>) attributes {dimension_semantics = [#tpu.dimension_semantics<arbitrary>], iteration_bounds = array<i64: 1>, scalar_prefetch = 0 : i64, scratch_operands = 1 : i64, tpu.core_type = #tpu.core_type<tc>, window_params = [{pipeline_mode = #tpu.pipeline_mode<synchronous>, transform_indices = @transform_0, window_bounds = array<i64: 1, 512>}, {transform_indices = @transform_1, window_bounds = array<i64: 8, 512>}, {pipeline_mode = #tpu.pipeline_mode<synchronous>, transform_indices = @transform_2, window_bounds = array<i64: 512, 512>}, {pipeline_mode = #tpu.pipeline_mode<synchronous>, transform_indices = @transform_3, window_bounds = array<i64: 512, 512>}, {pipeline_mode = #tpu.pipeline_mode<synchronous>, transform_indices = @transform_4, window_bounds = array<i64: 1, 512>}, {pipeline_mode = #tpu.pipeline_mode<synchronous>, transform_indices = @transform_5, window_bounds = array<i64: 1, 512>}]} {
    %c0_i32 = arith.constant 0 : i32
    %0 = arith.cmpi eq, %arg0, %c0_i32 : i32
    %1 = arith.extui %0 : i1 to i32
    %c0_i32_0 = arith.constant 0 : i32
    %2 = arith.cmpi ne, %1, %c0_i32_0 : i32
    scf.if %2 {
      %cst_16 = arith.constant 0.000000e+00 : f32
      %30 = vector.broadcast %cst_16 : f32 to vector<1x512xf32>
      %c0_17 = arith.constant 0 : index
      %c0_18 = arith.constant 0 : index
      %31 = vector.load %arg6[%c0_17, %c0_18] : memref<1x512xf32, #tpu.memory_space<vmem>>, vector<1x512xf32>
      tpu.vector_store %arg6[%c0_17, %c0_18], %30 {strides = array<i32>} : memref<1x512xf32, #tpu.memory_space<vmem>>, vector<1x512xf32>,
      %c0_19 = arith.constant 0 : index
      %c0_20 = arith.constant 0 : index
      %32 = vector.load %arg1[%c0_19, %c0_20] : memref<1x512xf32, #tpu.memory_space<vmem>>, vector<1x512xf32>
      %33 = arith.truncf %32 : vector<1x512xf32> to vector<1x512xbf16>
      %c0_21 = arith.constant 0 : index
      %c0_22 = arith.constant 0 : index
      %34 = vector.load %arg3[%c0_21, %c0_22] : memref<512x512xbf16, #tpu.memory_space<vmem>>, vector<512x512xbf16>
      %cst_23 = arith.constant dense<0.000000e+00> : vector<1x512xf32>
      %35 = tpu.matmul %33, %34, %cst_23 {dimension_numbers = #tpu.dot_dimension_numbers<[1], [0], [0], [1], [0, 0, 1, 1], [], []>} : vector<1x512xbf16>, vector<512x512xbf16>, vector<1x512xf32> -> vector<1x512xf32>
      %c0_24 = arith.constant 0 : index
      %c0_25 = arith.constant 0 : index
      %36 = vector.load %arg7[%c0_24, %c0_25] : memref<1x512xf32, #tpu.memory_space<vmem>>, vector<1x512xf32>
      tpu.vector_store %arg7[%c0_24, %c0_25], %35 {strides = array<i32>} : memref<1x512xf32, #tpu.memory_space<vmem>>, vector<1x512xf32>,
    } else {
    }
    %c0 = arith.constant 0 : index
    %c0_1 = arith.constant 0 : index
    %3 = vector.load %arg2[%c0, %c0_1] : memref<8x512xf32, #tpu.memory_space<vmem>>, vector<8x512xf32>
    %4 = arith.truncf %3 : vector<8x512xf32> to vector<8x512xbf16>
    %c0_2 = arith.constant 0 : index
    %c0_3 = arith.constant 0 : index
    %5 = vector.load %arg4[%c0_2, %c0_3] : memref<512x512xbf16, #tpu.memory_space<vmem>>, vector<512x512xbf16>
    %cst = arith.constant dense<0.000000e+00> : vector<8x512xf32>
    %6 = tpu.matmul %4, %5, %cst {dimension_numbers = #tpu.dot_dimension_numbers<[1], [0], [0], [1], [0, 0, 1, 1], [], []>} : vector<8x512xbf16>, vector<512x512xbf16>, vector<8x512xf32> -> vector<8x512xf32>
    %c0_4 = arith.constant 0 : index
    %c0_5 = arith.constant 0 : index
    %7 = vector.load %arg7[%c0_4, %c0_5] : memref<1x512xf32, #tpu.memory_space<vmem>>, vector<1x512xf32>
    %8 = vector.broadcast %7 : vector<1x512xf32> to vector<8x512xf32>
    %9 = arith.addf %6, %8 : vector<8x512xf32>
    %10 = math.tanh %9 : vector<8x512xf32>
    %c0_6 = arith.constant 0 : index
    %c0_7 = arith.constant 0 : index
    %11 = vector.load %arg5[%c0_6, %c0_7] : memref<1x512xf32, #tpu.memory_space<vmem>>, vector<1x512xf32>
    %12 = vector.broadcast %11 : vector<1x512xf32> to vector<8x512xf32>
    %13 = arith.mulf %10, %12 : vector<8x512xf32>
    %cst_8 = arith.constant dense<0.000000e+00> : vector<8xf32>
    %14 = vector.multi_reduction <add>, %13, %cst_8 [1] : vector<8x512xf32> to vector<8xf32>
    %15 = vector.shape_cast %14 : vector<8xf32> to vector<8x1xf32>
    %cst_9 = arith.constant dense<0xFF800000> : vector<8xf32>
    %16 = vector.multi_reduction <maximumf>, %15, %cst_9 [1] : vector<8x1xf32> to vector<8xf32>
    %17 = vector.shape_cast %16 : vector<8xf32> to vector<8x1xf32>
    %18 = arith.subf %15, %17 : vector<8x1xf32>
    %19 = math.exp %18 : vector<8x1xf32>
    %cst_10 = arith.constant dense<0.000000e+00> : vector<8xf32>
    %20 = vector.multi_reduction <add>, %19, %cst_10 [1] : vector<8x1xf32> to vector<8xf32>
    %21 = vector.shape_cast %20 : vector<8xf32> to vector<8x1xf32>
    %22 = arith.divf %19, %21 : vector<8x1xf32>
    %c0_11 = arith.constant 0 : index
    %c0_12 = arith.constant 0 : index
    %23 = vector.load %arg6[%c0_11, %c0_12] : memref<1x512xf32, #tpu.memory_space<vmem>>, vector<1x512xf32>
    %24 = vector.broadcast %22 : vector<8x1xf32> to vector<8x512xf32>
    %25 = arith.mulf %24, %3 : vector<8x512xf32>
    %cst_13 = arith.constant dense<0.000000e+00> : vector<512xf32>
    %26 = vector.multi_reduction <add>, %25, %cst_13 [0] : vector<8x512xf32> to vector<512xf32>
    %27 = vector.shape_cast %26 : vector<512xf32> to vector<1x512xf32>
    %28 = arith.addf %23, %27 : vector<1x512xf32>
    %c0_14 = arith.constant 0 : index
    %c0_15 = arith.constant 0 : index
    %29 = vector.load %arg6[%c0_14, %c0_15] : memref<1x512xf32, #tpu.memory_space<vmem>>, vector<1x512xf32>
    tpu.vector_store %arg6[%c0_14, %c0_15], %28 {strides = array<i32>} : memref<1x512xf32, #tpu.memory_space<vmem>>, vector<1x512xf32>,
    return
  }
  func.func @transform_0(%arg0: i32) -> (i32, i32) {
    %c0_i32 = arith.constant 0 : i32
    %c0_i32_0 = arith.constant 0 : i32
    %c0_i32_1 = arith.constant 0 : i32
    return %c0_i32, %c0_i32_0 : i32, i32
  }
  func.func @transform_1(%arg0: i32) -> (i32, i32) {
    %c0_i32 = arith.constant 0 : i32
    %c0_i32_0 = arith.constant 0 : i32
    return %arg0, %c0_i32 : i32, i32
  }
  func.func @transform_2(%arg0: i32) -> (i32, i32) {
    %c0_i32 = arith.constant 0 : i32
    %c0_i32_0 = arith.constant 0 : i32
    %c0_i32_1 = arith.constant 0 : i32
    return %c0_i32, %c0_i32_0 : i32, i32
  }
  func.func @transform_3(%arg0: i32) -> (i32, i32) {
    %c0_i32 = arith.constant 0 : i32
    %c0_i32_0 = arith.constant 0 : i32
    %c0_i32_1 = arith.constant 0 : i32
    return %c0_i32, %c0_i32_0 : i32, i32
  }
  func.func @transform_4(%arg0: i32) -> (i32, i32) {
    %c0_i32 = arith.constant 0 : i32
    %c0_i32_0 = arith.constant 0 : i32
    %c0_i32_1 = arith.constant 0 : i32
    return %c0_i32, %c0_i32_0 : i32, i32
  }
  func.func @transform_5(%arg0: i32) -> (i32, i32) {
    %c0_i32 = arith.constant 0 : i32
    %c0_i32_0 = arith.constant 0 : i32
    %c0_i32_1 = arith.constant 0 : i32
    return %c0_i32, %c0_i32_0 : i32, i32
  }
}

</mosaic_0001>

<llo_original>
// kernel: tpu_custom_call.1
$region0: #{tpu_custom_call.1}
  #allocation0 [shape = 'u32[]', space=smem, size = 0x4, offset = 0x4, fixed_abs, tag = 'smem constant byte address 0x4 - core index']
  #allocation1 [shape = 'u32[72,128]{1,0:T(1,128)}', space=vmem, size = 0x9000, scoped, tag = 'internal scratch']
  #allocation2 [shape = 'f32[1,512]{1,0:T(1,128)}', space=vmem, size = 0x800, scoped, tag = 'scratch operand']
  %s0 = inlined_call_operand.hbm [shape: f32[1,512], index: 0, kind: input, shape index: {}]
  %s1 = inlined_call_operand.hbm [shape: f32[8,512], index: 1, kind: input, shape index: {}]
  %s2 = inlined_call_operand.hbm [shape: bf16[512,512], index: 2, kind: input, shape index: {}]
  %s3 = inlined_call_operand.hbm [shape: bf16[512,512], index: 3, kind: input, shape index: {}]
  %s4 = inlined_call_operand.hbm [shape: f32[1,512], index: 4, kind: input, shape index: {}]
  %s5 = inlined_call_operand.hbm [shape: f32[1,512], index: 5, kind: output, shape index: {}]
  %s6 = sld [smem:[#allocation0]]
  $region54: #{tpu_custom_call.1} parent=0
    _
  %s8 = ssub.s32 1, %s6
  %s9 = scalar_select 0, %s8, %s6
  $region1: #{tpu_custom_call.1} parent=0
    #allocation3 [shape = 'u8[2048]{0}', space=vmem, size = 0x800, scoped, tag = 'input window, operand 0, single buffered']
    #allocation4 [shape = 's32[1]{0}', space=sflag, size = 0x4, scoped, tag = 'scoped memory for tpu_custom_call.1']
    #allocation5 [shape = 's32[1]{0}', space=sflag, size = 0x4, scoped, tag = 'scoped memory for tpu_custom_call.1']
    #allocation6 [shape = 'u8[16384]{0}', space=vmem, size = 0x4000, scoped, tag = 'input window, operand 1, single buffered']
    #allocation7 [shape = 's32[1]{0}', space=sflag, size = 0x4, scoped, tag = 'scoped memory for tpu_custom_call.1']
    #allocation8 [shape = 'u8[524288]{0}', space=vmem, size = 0x80000, scoped, tag = 'input window, operand 2, single buffered']
    #allocation9 [shape = 'u8[524288]{0}', space=vmem, size = 0x80000, scoped, tag = 'input window, operand 3, single buffered']
    #allocation10 [shape = 's32[1]{0}', space=sflag, size = 0x4, scoped, tag = 'scoped memory for tpu_custom_call.1']
    #allocation11 [shape = 'u8[2048]{0}', space=vmem, size = 0x800, scoped, tag = 'input window, operand 4, single buffered']
    #allocation12 [shape = 'u8[2048]{0}', space=vmem, size = 0x800, scoped, tag = 'output window, operand 0, single buffered']
    %10 = vsyncpa [#allocation4], 0
    %11 = vsyncpa [#allocation7], 0
    %12 = vsyncpa [#allocation10], 0
    %13 = vsyncpa [#allocation5], 0
    // Predicated region
    $region2: #{tpu_custom_call.1} parent=1 // pred_check
      _
    $region3: #{tpu_custom_call.1} parent=1 // pred_check_branch
      %15 = sbr.rel (0) target = $region5
    $region4: #{tpu_custom_call.1} parent=1 // pred_region
      %17 = vsyncadd [#allocation4], 0
      %s19 = sshll.u32 %s0, 4
      %s20 = int_to_ptr.hbm [resolvable:$true] %s19
      %s21 = sshll.u32 [#allocation3], 4
      %s22 = int_to_ptr.vmem [resolvable:$true] %s21
      %24 = dma.hbm_to_vmem [thread:$0]  %s20, 64, %s22, [#allocation4]
    $region5: #{tpu_custom_call.1} parent=1 // pred_fallthru
      _
    // Predicated region
    $region6: #{tpu_custom_call.1} parent=1 // pred_check
      _
    $region7: #{tpu_custom_call.1} parent=1 // pred_check_branch
      %26 = sbr.rel (0) target = $region9
    $region8: #{tpu_custom_call.1} parent=1 // pred_region
      %28 = vsyncadd [#allocation7], 0
      %s30 = sshll.u32 %s1, 4
      %s31 = int_to_ptr.hbm [resolvable:$true] %s30
      %s32 = sshll.u32 [#allocation6], 4
      %s33 = int_to_ptr.vmem [resolvable:$true] %s32
      %35 = dma.hbm_to_vmem [thread:$0]  %s31, 512, %s33, [#allocation7]
    $region9: #{tpu_custom_call.1} parent=1 // pred_fallthru
      _
    // Predicated region
    $region10: #{tpu_custom_call.1} parent=1 // pred_check
      _
    $region11: #{tpu_custom_call.1} parent=1 // pred_check_branch
      %37 = sbr.rel (0) target = $region13
    $region12: #{tpu_custom_call.1} parent=1 // pred_region
      %39 = vsyncadd [#allocation7], 0
      %s40 = sshll.u32 %s2, 4
      %s41 = int_to_ptr.hbm [resolvable:$true] %s40
      %s42 = sshll.u32 [#allocation8], 4
      %s43 = int_to_ptr.vmem [resolvable:$true] %s42
      %48 = dma.hbm_to_vmem [thread:$0]  %s41, 16384, %s43, [#allocation7], 256, 256, 16
    $region13: #{tpu_custom_call.1} parent=1 // pred_fallthru
      _
    // Predicated region
    $region14: #{tpu_custom_call.1} parent=1 // pred_check
      _
    $region15: #{tpu_custom_call.1} parent=1 // pred_check_branch
      %50 = sbr.rel (0) target = $region17
    $region16: #{tpu_custom_call.1} parent=1 // pred_region
      %52 = vsyncadd [#allocation10], 0
      %s53 = sshll.u32 %s3, 4
      %s54 = int_to_ptr.hbm [resolvable:$true] %s53
      %s55 = sshll.u32 [#allocation9], 4
      %s56 = int_to_ptr.vmem [resolvable:$true] %s55
      %61 = dma.hbm_to_vmem [thread:$0]  %s54, 16384, %s56, [#allocation10], 256, 256, 16
    $region17: #{tpu_custom_call.1} parent=1 // pred_fallthru
      _
    // Predicated region
    $region18: #{tpu_custom_call.1} parent=1 // pred_check
      _
    $region19: #{tpu_custom_call.1} parent=1 // pred_check_branch
      %63 = sbr.rel (0) target = $region21
    $region20: #{tpu_custom_call.1} parent=1 // pred_region
      %65 = vsyncadd [#allocation10], 0
      %s67 = sshll.u32 %s4, 4
      %s68 = int_to_ptr.hbm [resolvable:$true] %s67
      %s69 = sshll.u32 [#allocation11], 4
      %s70 = int_to_ptr.vmem [resolvable:$true] %s69
      %72 = dma.hbm_to_vmem [thread:$0]  %s68, 64, %s70, [#allocation10]
    $region21: #{tpu_custom_call.1} parent=1 // pred_fallthru
      _
    // Predicated region
    $region22: #{tpu_custom_call.1} parent=1 // pred_check
      _
    $region23: #{tpu_custom_call.1} parent=1 // pred_check_branch
      %74 = sbr.rel (0) target = $region25
    $region24: #{tpu_custom_call.1} parent=1 // pred_region
      %76 = dma.done [#allocation4], 64
    $region25: #{tpu_custom_call.1} parent=1 // pred_fallthru
      _
    // Predicated region
    $region26: #{tpu_custom_call.1} parent=1 // pred_check
      _
    $region27: #{tpu_custom_call.1} parent=1 // pred_check_branch
      %78 = sbr.rel (0) target = $region29
    $region28: #{tpu_custom_call.1} parent=1 // pred_region
      %80 = dma.done [#allocation7], 512
    $region29: #{tpu_custom_call.1} parent=1 // pred_fallthru
      _
    // Predicated region
    $region30: #{tpu_custom_call.1} parent=1 // pred_check
      _
    $region31: #{tpu_custom_call.1} parent=1 // pred_check_branch
      %82 = sbr.rel (0) target = $region33
    $region32: #{tpu_custom_call.1} parent=1 // pred_region
      %84 = dma.done [#allocation7], 16384
    $region33: #{tpu_custom_call.1} parent=1 // pred_fallthru
      _
    // Predicated region
    $region34: #{tpu_custom_call.1} parent=1 // pred_check
      _
    $region35: #{tpu_custom_call.1} parent=1 // pred_check_branch
      %86 = sbr.rel (0) target = $region37
    $region36: #{tpu_custom_call.1} parent=1 // pred_region
      %88 = dma.done [#allocation10], 16384
    $region37: #{tpu_custom_call.1} parent=1 // pred_fallthru
      _
    // Predicated region
    $region38: #{tpu_custom_call.1} parent=1 // pred_check
      _
    $region39: #{tpu_custom_call.1} parent=1 // pred_check_branch
      %90 = sbr.rel (0) target = $region41
    $region40: #{tpu_custom_call.1} parent=1 // pred_region
      %92 = dma.done [#allocation10], 64
    $region41: #{tpu_custom_call.1} parent=1 // pred_fallthru
      _
    %p93 = scmp.eq.s32.totalorder 0, 0
    // Predicated region
    $region42: #{tpu_custom_call.1} parent=1 // pred_check
      %p94 = pneg %p93
    $region43: #{tpu_custom_call.1} parent=1 // pred_check_branch
      %96 = sbr.rel (%p94) target = $region45
    $region44: #{tpu_custom_call.1} parent=1 // pred_region
      %v97 = vlaneseq
      %vm98 = vcmp.ge.s32.totalorder %v97, 0
      %vm99 = vcmp.lt.s32.totalorder %v97, 512
      %vm100 = vmand %vm98, %vm99
      %101 = vst.msk [vmem:[#allocation12] sm:$0xf] %vm100, 0.0
      %v102 = vld [vmem:[#allocation3] sm:$0xf]
      %v104 = vperm.slane %v102, 0
      %v105 = vperm.slane %v102, 1
      %v106 = vperm.slane %v102, 2
      %v107 = vperm.slane %v102, 3
      %v112 = vpack.c.bf16 %v104, %v104
      %v113 = vpack.c.bf16 %v105, %v105
      %v114 = vpack.c.bf16 %v106, %v106
      %v115 = vpack.c.bf16 %v107, %v107
      %v116 = vld [vmem:[#allocation8] sm:$0xff]
      %v117 = vld [vmem:[#allocation8 + $0x8] sm:$0xff]
      %v118 = vld [vmem:[#allocation8 + $0x10] sm:$0xff]
      %v119 = vld [vmem:[#allocation8 + $0x18] sm:$0xff]
      %v120 = vld [vmem:[#allocation8 + $0x20] sm:$0xff]
      %v121 = vld [vmem:[#allocation8 + $0x28] sm:$0xff]
      %v122 = vld [vmem:[#allocation8 + $0x30] sm:$0xff]
      %v123 = vld [vmem:[#allocation8 + $0x38] sm:$0xff]
      %v124 = vld [vmem:[#allocation8 + $0x40] sm:$0xff]
      %v125 = vld [vmem:[#allocation8 + $0x48] sm:$0xff]
      %v126 = vld [vmem:[#allocation8 + $0x50] sm:$0xff]
      %v127 = vld [vmem:[#allocation8 + $0x58] sm:$0xff]
      %v128 = vld [vmem:[#allocation8 + $0x60] sm:$0xff]
      %v129 = vld [vmem:[#allocation8 + $0x68] sm:$0xff]
      %v130 = vld [vmem:[#allocation8 + $0x70] sm:$0xff]
      %v131 = vld [vmem:[#allocation8 + $0x78] sm:$0xff]
      %v132 = vld [vmem:[#allocation8 + $0x80] sm:$0xff]
      %v133 = vld [vmem:[#allocation8 + $0x88] sm:$0xff]
      %v134 = vld [vmem:[#allocation8 + $0x90] sm:$0xff]
      %v135 = vld [vmem:[#allocation8 + $0x98] sm:$0xff]
      %v136 = vld [vmem:[#allocation8 + $0xa0] sm:$0xff]
      %v137 = vld [vmem:[#allocation8 + $0xa8] sm:$0xff]
      %v138 = vld [vmem:[#allocation8 + $0xb0] sm:$0xff]
      %v139 = vld [vmem:[#allocation8 + $0xb8] sm:$0xff]
      %v140 = vld [vmem:[#allocation8 + $0xc0] sm:$0xff]
      %v141 = vld [vmem:[#allocation8 + $0xc8] sm:$0xff]
      %v142 = vld [vmem:[#allocation8 + $0xd0] sm:$0xff]
      %v143 = vld [vmem:[#allocation8 + $0xd8] sm:$0xff]
      %v144 = vld [vmem:[#allocation8 + $0xe0] sm:$0xff]
      %v145 = vld [vmem:[#allocation8 + $0xe8] sm:$0xff]
      %v146 = vld [vmem:[#allocation8 + $0xf0] sm:$0xff]
      %v147 = vld [vmem:[#allocation8 + $0xf8] sm:$0xff]
      %v148 = vld [vmem:[#allocation8 + $0x100] sm:$0xff]
      %v149 = vld [vmem:[#allocation8 + $0x108] sm:$0xff]
      %v150 = vld [vmem:[#allocation8 + $0x110] sm:$0xff]
      %v151 = vld [vmem:[#allocation8 + $0x118] sm:$0xff]
      %v152 = vld [vmem:[#allocation8 + $0x120] sm:$0xff]
      %v153 = vld [vmem:[#allocation8 + $0x128] sm:$0xff]
      %v154 = vld [vmem:[#allocation8 + $0x130] sm:$0xff]
      %v155 = vld [vmem:[#allocation8 + $0x138] sm:$0xff]
      %v156 = vld [vmem:[#allocation8 + $0x140] sm:$0xff]
      %v157 = vld [vmem:[#allocation8 + $0x148] sm:$0xff]
      %v158 = vld [vmem:[#allocation8 + $0x150] sm:$0xff]
      %v159 = vld [vmem:[#allocation8 + $0x158] sm:$0xff]
      %v160 = vld [vmem:[#allocation8 + $0x160] sm:$0xff]
      %v161 = vld [vmem:[#allocation8 + $0x168] sm:$0xff]
      %v162 = vld [vmem:[#allocation8 + $0x170] sm:$0xff]
      %v163 = vld [vmem:[#allocation8 + $0x178] sm:$0xff]
      %v164 = vld [vmem:[#allocation8 + $0x180] sm:$0xff]
      %v165 = vld [vmem:[#allocation8 + $0x188] sm:$0xff]
      %v166 = vld [vmem:[#allocation8 + $0x190] sm:$0xff]
      %v167 = vld [vmem:[#allocation8 + $0x198] sm:$0xff]
      %v168 = vld [vmem:[#allocation8 + $0x1a0] sm:$0xff]
      %v169 = vld [vmem:[#allocation8 + $0x1a8] sm:$0xff]
      %v170 = vld [vmem:[#allocation8 + $0x1b0] sm:$0xff]
      %v171 = vld [vmem:[#allocation8 + $0x1b8] sm:$0xff]
      %v172 = vld [vmem:[#allocation8 + $0x1c0] sm:$0xff]
      %v173 = vld [vmem:[#allocation8 + $0x1c8] sm:$0xff]
      %v174 = vld [vmem:[#allocation8 + $0x1d0] sm:$0xff]
      %v175 = vld [vmem:[#allocation8 + $0x1d8] sm:$0xff]
      %v176 = vld [vmem:[#allocation8 + $0x1e0] sm:$0xff]
      %v177 = vld [vmem:[#allocation8 + $0x1e8] sm:$0xff]
      %v178 = vld [vmem:[#allocation8 + $0x1f0] sm:$0xff]
      %v179 = vld [vmem:[#allocation8 + $0x1f8] sm:$0xff]
      %v180 = vld [vmem:[#allocation8 + $0x200] sm:$0xff]
      %v181 = vld [vmem:[#allocation8 + $0x208] sm:$0xff]
      %v182 = vld [vmem:[#allocation8 + $0x210] sm:$0xff]
      %v183 = vld [vmem:[#allocation8 + $0x218] sm:$0xff]
      %v184 = vld [vmem:[#allocation8 + $0x220] sm:$0xff]
      %v185 = vld [vmem:[#allocation8 + $0x228] sm:$0xff]
      %v186 = vld [vmem:[#allocation8 + $0x230] sm:$0xff]
      %v187 = vld [vmem:[#allocation8 + $0x238] sm:$0xff]
      %v188 = vld [vmem:[#allocation8 + $0x240] sm:$0xff]
      %v189 = vld [vmem:[#allocation8 + $0x248] sm:$0xff]
      %v190 = vld [vmem:[#allocation8 + $0x250] sm:$0xff]
      %v191 = vld [vmem:[#allocation8 + $0x258] sm:$0xff]
      %v192 = vld [vmem:[#allocation8 + $0x260] sm:$0xff]
      %v193 = vld [vmem:[#allocation8 + $0x268] sm:$0xff]
      %v194 = vld [vmem:[#allocation8 + $0x270] sm:$0xff]
      %v195 = vld [vmem:[#allocation8 + $0x278] sm:$0xff]
      %v196 = vld [vmem:[#allocation8 + $0x280] sm:$0xff]
      %v197 = vld [vmem:[#allocation8 + $0x288] sm:$0xff]
      %v198 = vld [vmem:[#allocation8 + $0x290] sm:$0xff]
      %v199 = vld [vmem:[#allocation8 + $0x298] sm:$0xff]
      %v200 = vld [vmem:[#allocation8 + $0x2a0] sm:$0xff]
      %v201 = vld [vmem:[#allocation8 + $0x2a8] sm:$0xff]
      %v202 = vld [vmem:[#allocation8 + $0x2b0] sm:$0xff]
      %v203 = vld [vmem:[#allocation8 + $0x2b8] sm:$0xff]
      %v204 = vld [vmem:[#allocation8 + $0x2c0] sm:$0xff]
      %v205 = vld [vmem:[#allocation8 + $0x2c8] sm:$0xff]
      %v206 = vld [vmem:[#allocation8 + $0x2d0] sm:$0xff]
      %v207 = vld [vmem:[#allocation8 + $0x2d8] sm:$0xff]
      %v208 = vld [vmem:[#allocation8 + $0x2e0] sm:$0xff]
      %v209 = vld [vmem:[#allocation8 + $0x2e8] sm:$0xff]
      %v210 = vld [vmem:[#allocation8 + $0x2f0] sm:$0xff]
      %v211 = vld [vmem:[#allocation8 + $0x2f8] sm:$0xff]
      %v212 = vld [vmem:[#allocation8 + $0x300] sm:$0xff]
      %v213 = vld [vmem:[#allocation8 + $0x308] sm:$0xff]
      %v214 = vld [vmem:[#allocation8 + $0x310] sm:$0xff]
      %v215 = vld [vmem:[#allocation8 + $0x318] sm:$0xff]
      %v216 = vld [vmem:[#allocation8 + $0x320] sm:$0xff]
      %v217 = vld [vmem:[#allocation8 + $0x328] sm:$0xff]
      %v218 = vld [vmem:[#allocation8 + $0x330] sm:$0xff]
      %v219 = vld [vmem:[#allocation8 + $0x338] sm:$0xff]
      %v220 = vld [vmem:[#allocation8 + $0x340] sm:$0xff]
      %v221 = vld [vmem:[#allocation8 + $0x348] sm:$0xff]
      %v222 = vld [vmem:[#allocation8 + $0x350] sm:$0xff]
      %v223 = vld [vmem:[#allocation8 + $0x358] sm:$0xff]
      %v224 = vld [vmem:[#allocation8 + $0x360] sm:$0xff]
      %v225 = vld [vmem:[#allocation8 + $0x368] sm:$0xff]
      %v226 = vld [vmem:[#allocation8 + $0x370] sm:$0xff]
      %v227 = vld [vmem:[#allocation8 + $0x378] sm:$0xff]
      %v228 = vld [vmem:[#allocation8 + $0x380] sm:$0xff]
      %v229 = vld [vmem:[#allocation8 + $0x388] sm:$0xff]
      %v230 = vld [vmem:[#allocation8 + $0x390] sm:$0xff]
      %v231 = vld [vmem:[#allocation8 + $0x398] sm:$0xff]
      %v232 = vld [vmem:[#allocation8 + $0x3a0] sm:$0xff]
      %v233 = vld [vmem:[#allocation8 + $0x3a8] sm:$0xff]
      %v234 = vld [vmem:[#allocation8 + $0x3b0] sm:$0xff]
      %v235 = vld [vmem:[#allocation8 + $0x3b8] sm:$0xff]
      %v236 = vld [vmem:[#allocation8 + $0x3c0] sm:$0xff]
      %v237 = vld [vmem:[#allocation8 + $0x3c8] sm:$0xff]
      %v238 = vld [vmem:[#allocation8 + $0x3d0] sm:$0xff]
      %v239 = vld [vmem:[#allocation8 + $0x3d8] sm:$0xff]
      %v240 = vld [vmem:[#allocation8 + $0x3e0] sm:$0xff]
      %v241 = vld [vmem:[#allocation8 + $0x3e8] sm:$0xff]
      %v242 = vld [vmem:[#allocation8 + $0x3f0] sm:$0xff]
      %v243 = vld [vmem:[#allocation8 + $0x3f8] sm:$0xff]
      %v372 = vunpack.c.l.b16 %v116
      %v373 = vunpack.c.h.b16 %v116
      %v374 = vunpack.c.l.b16 %v117
      %v375 = vunpack.c.h.b16 %v117
      %v376 = vunpack.c.l.b16 %v118
      %v377 = vunpack.c.h.b16 %v118
      %v378 = vunpack.c.l.b16 %v119
      %v379 = vunpack.c.h.b16 %v119
      %v380 = vunpack.c.l.b16 %v120
      %v381 = vunpack.c.h.b16 %v120
      %v382 = vunpack.c.l.b16 %v121
      %v383 = vunpack.c.h.b16 %v121
      %v384 = vunpack.c.l.b16 %v122
      %v385 = vunpack.c.h.b16 %v122
      %v386 = vunpack.c.l.b16 %v123
      %v387 = vunpack.c.h.b16 %v123
      %v388 = vunpack.c.l.b16 %v124
      %v389 = vunpack.c.h.b16 %v124
      %v390 = vunpack.c.l.b16 %v125
      %v391 = vunpack.c.h.b16 %v125
      %v392 = vunpack.c.l.b16 %v126
      %v393 = vunpack.c.h.b16 %v126
      %v394 = vunpack.c.l.b16 %v127
      %v395 = vunpack.c.h.b16 %v127
      %v396 = vunpack.c.l.b16 %v128
      %v397 = vunpack.c.h.b16 %v128
      %v398 = vunpack.c.l.b16 %v129
      %v399 = vunpack.c.h.b16 %v129
      %v400 = vunpack.c.l.b16 %v130
      %v401 = vunpack.c.h.b16 %v130
      %v402 = vunpack.c.l.b16 %v131
      %v403 = vunpack.c.h.b16 %v131
      %v404 = vunpack.c.l.b16 %v132
      %v405 = vunpack.c.h.b16 %v132
      %v406 = vunpack.c.l.b16 %v133
      %v407 = vunpack.c.h.b16 %v133
      %v408 = vunpack.c.l.b16 %v134
      %v409 = vunpack.c.h.b16 %v134
      %v410 = vunpack.c.l.b16 %v135
      %v411 = vunpack.c.h.b16 %v135
      %v412 = vunpack.c.l.b16 %v136
      %v413 = vunpack.c.h.b16 %v136
      %v414 = vunpack.c.l.b16 %v137
      %v415 = vunpack.c.h.b16 %v137
      %v416 = vunpack.c.l.b16 %v138
      %v417 = vunpack.c.h.b16 %v138
      %v418 = vunpack.c.l.b16 %v139
      %v419 = vunpack.c.h.b16 %v139
      %v420 = vunpack.c.l.b16 %v140
      %v421 = vunpack.c.h.b16 %v140
      %v422 = vunpack.c.l.b16 %v141
      %v423 = vunpack.c.h.b16 %v141
      %v424 = vunpack.c.l.b16 %v142
      %v425 = vunpack.c.h.b16 %v142
      %v426 = vunpack.c.l.b16 %v143
      %v427 = vunpack.c.h.b16 %v143
      %v428 = vunpack.c.l.b16 %v144
      %v429 = vunpack.c.h.b16 %v144
      %v430 = vunpack.c.l.b16 %v145
      %v431 = vunpack.c.h.b16 %v145
      %v432 = vunpack.c.l.b16 %v146
      %v433 = vunpack.c.h.b16 %v146
      %v434 = vunpack.c.l.b16 %v147
      %v435 = vunpack.c.h.b16 %v147
      %v436 = vunpack.c.l.b16 %v148
      %v437 = vunpack.c.h.b16 %v148
      %v438 = vunpack.c.l.b16 %v149
      %v439 = vunpack.c.h.b16 %v149
      %v440 = vunpack.c.l.b16 %v150
      %v441 = vunpack.c.h.b16 %v150
      %v442 = vunpack.c.l.b16 %v151
      %v443 = vunpack.c.h.b16 %v151
      %v444 = vunpack.c.l.b16 %v152
      %v445 = vunpack.c.h.b16 %v152
      %v446 = vunpack.c.l.b16 %v153
      %v447 = vunpack.c.h.b16 %v153
      %v448 = vunpack.c.l.b16 %v154
      %v449 = vunpack.c.h.b16 %v154
      %v450 = vunpack.c.l.b16 %v155
      %v451 = vunpack.c.h.b16 %v155
      %v452 = vunpack.c.l.b16 %v156
      %v453 = vunpack.c.h.b16 %v156
      %v454 = vunpack.c.l.b16 %v157
      %v455 = vunpack.c.h.b16 %v157
      %v456 = vunpack.c.l.b16 %v158
      %v457 = vunpack.c.h.b16 %v158
      %v458 = vunpack.c.l.b16 %v159
      %v459 = vunpack.c.h.b16 %v159
      %v460 = vunpack.c.l.b16 %v160
      %v461 = vunpack.c.h.b16 %v160
      %v462 = vunpack.c.l.b16 %v161
      %v463 = vunpack.c.h.b16 %v161
      %v464 = vunpack.c.l.b16 %v162
      %v465 = vunpack.c.h.b16 %v162
      %v466 = vunpack.c.l.b16 %v163
      %v467 = vunpack.c.h.b16 %v163
      %v468 = vunpack.c.l.b16 %v164
      %v469 = vunpack.c.h.b16 %v164
      %v470 = vunpack.c.l.b16 %v165
      %v471 = vunpack.c.h.b16 %v165
      %v472 = vunpack.c.l.b16 %v166
      %v473 = vunpack.c.h.b16 %v166
      %v474 = vunpack.c.l.b16 %v167
      %v475 = vunpack.c.h.b16 %v167
      %v476 = vunpack.c.l.b16 %v168
      %v477 = vunpack.c.h.b16 %v168
      %v478 = vunpack.c.l.b16 %v169
      %v479 = vunpack.c.h.b16 %v169
      %v480 = vunpack.c.l.b16 %v170
      %v481 = vunpack.c.h.b16 %v170
      %v482 = vunpack.c.l.b16 %v171
      %v483 = vunpack.c.h.b16 %v171
      %v484 = vunpack.c.l.b16 %v172
      %v485 = vunpack.c.h.b16 %v172
      %v486 = vunpack.c.l.b16 %v173
      %v487 = vunpack.c.h.b16 %v173
      %v488 = vunpack.c.l.b16 %v174
      %v489 = vunpack.c.h.b16 %v174
      %v490 = vunpack.c.l.b16 %v175
      %v491 = vunpack.c.h.b16 %v175
      %v492 = vunpack.c.l.b16 %v176
      %v493 = vunpack.c.h.b16 %v176
      %v494 = vunpack.c.l.b16 %v177
      %v495 = vunpack.c.h.b16 %v177
      %v496 = vunpack.c.l.b16 %v178
      %v497 = vunpack.c.h.b16 %v178
      %v498 = vunpack.c.l.b16 %v179
      %v499 = vunpack.c.h.b16 %v179
      %v500 = vunpack.c.l.b16 %v180
      %v501 = vunpack.c.h.b16 %v180
      %v502 = vunpack.c.l.b16 %v181
      %v503 = vunpack.c.h.b16 %v181
      %v504 = vunpack.c.l.b16 %v182
      %v505 = vunpack.c.h.b16 %v182
      %v506 = vunpack.c.l.b16 %v183
      %v507 = vunpack.c.h.b16 %v183
      %v508 = vunpack.c.l.b16 %v184
      %v509 = vunpack.c.h.b16 %v184
      %v510 = vunpack.c.l.b16 %v185
      %v511 = vunpack.c.h.b16 %v185
      %v512 = vunpack.c.l.b16 %v186
      %v513 = vunpack.c.h.b16 %v186
      %v514 = vunpack.c.l.b16 %v187
      %v515 = vunpack.c.h.b16 %v187
      %v516 = vunpack.c.l.b16 %v188
      %v517 = vunpack.c.h.b16 %v188
      %v518 = vunpack.c.l.b16 %v189
      %v519 = vunpack.c.h.b16 %v189
      %v520 = vunpack.c.l.b16 %v190
      %v521 = vunpack.c.h.b16 %v190
      %v522 = vunpack.c.l.b16 %v191
      %v523 = vunpack.c.h.b16 %v191
      %v524 = vunpack.c.l.b16 %v192
      %v525 = vunpack.c.h.b16 %v192
      %v526 = vunpack.c.l.b16 %v193
      %v527 = vunpack.c.h.b16 %v193
      %v528 = vunpack.c.l.b16 %v194
      %v529 = vunpack.c.h.b16 %v194
      %v530 = vunpack.c.l.b16 %v195
      %v531 = vunpack.c.h.b16 %v195
      %v532 = vunpack.c.l.b16 %v196
      %v533 = vunpack.c.h.b16 %v196
      %v534 = vunpack.c.l.b16 %v197
      %v535 = vunpack.c.h.b16 %v197
      %v536 = vunpack.c.l.b16 %v198
      %v537 = vunpack.c.h.b16 %v198
      %v538 = vunpack.c.l.b16 %v199
      %v539 = vunpack.c.h.b16 %v199
      %v540 = vunpack.c.l.b16 %v200
      %v541 = vunpack.c.h.b16 %v200
      %v542 = vunpack.c.l.b16 %v201
      %v543 = vunpack.c.h.b16 %v201
      %v544 = vunpack.c.l.b16 %v202
      %v545 = vunpack.c.h.b16 %v202
      %v546 = vunpack.c.l.b16 %v203
      %v547 = vunpack.c.h.b16 %v203
      %v548 = vunpack.c.l.b16 %v204
      %v549 = vunpack.c.h.b16 %v204
      %v550 = vunpack.c.l.b16 %v205
      %v551 = vunpack.c.h.b16 %v205
      %v552 = vunpack.c.l.b16 %v206
      %v553 = vunpack.c.h.b16 %v206
      %v554 = vunpack.c.l.b16 %v207
      %v555 = vunpack.c.h.b16 %v207
      %v556 = vunpack.c.l.b16 %v208
      %v557 = vunpack.c.h.b16 %v208
      %v558 = vunpack.c.l.b16 %v209
      %v559 = vunpack.c.h.b16 %v209
      %v560 = vunpack.c.l.b16 %v210
      %v561 = vunpack.c.h.b16 %v210
      %v562 = vunpack.c.l.b16 %v211
      %v563 = vunpack.c.h.b16 %v211
      %v564 = vunpack.c.l.b16 %v212
      %v565 = vunpack.c.h.b16 %v212
      %v566 = vunpack.c.l.b16 %v213
      %v567 = vunpack.c.h.b16 %v213
      %v568 = vunpack.c.l.b16 %v214
      %v569 = vunpack.c.h.b16 %v214
      %v570 = vunpack.c.l.b16 %v215
      %v571 = vunpack.c.h.b16 %v215
      %v572 = vunpack.c.l.b16 %v216
      %v573 = vunpack.c.h.b16 %v216
      %v574 = vunpack.c.l.b16 %v217
      %v575 = vunpack.c.h.b16 %v217
      %v576 = vunpack.c.l.b16 %v218
      %v577 = vunpack.c.h.b16 %v218
      %v578 = vunpack.c.l.b16 %v219
      %v579 = vunpack.c.h.b16 %v219
      %v580 = vunpack.c.l.b16 %v220
      %v581 = vunpack.c.h.b16 %v220
      %v582 = vunpack.c.l.b16 %v221
      %v583 = vunpack.c.h.b16 %v221
      %v584 = vunpack.c.l.b16 %v222
      %v585 = vunpack.c.h.b16 %v222
      %v586 = vunpack.c.l.b16 %v223
      %v587 = vunpack.c.h.b16 %v223
      %v588 = vunpack.c.l.b16 %v224
      %v589 = vunpack.c.h.b16 %v224
      %v590 = vunpack.c.l.b16 %v225
      %v591 = vunpack.c.h.b16 %v225
      %v592 = vunpack.c.l.b16 %v226
      %v593 = vunpack.c.h.b16 %v226
      %v594 = vunpack.c.l.b16 %v227
      %v595 = vunpack.c.h.b16 %v227
      %v596 = vunpack.c.l.b16 %v228
      %v597 = vunpack.c.h.b16 %v228
      %v598 = vunpack.c.l.b16 %v229
      %v599 = vunpack.c.h.b16 %v229
      %v600 = vunpack.c.l.b16 %v230
      %v601 = vunpack.c.h.b16 %v230
      %v602 = vunpack.c.l.b16 %v231
      %v603 = vunpack.c.h.b16 %v231
      %v604 = vunpack.c.l.b16 %v232
      %v605 = vunpack.c.h.b16 %v232
      %v606 = vunpack.c.l.b16 %v233
      %v607 = vunpack.c.h.b16 %v233
      %v608 = vunpack.c.l.b16 %v234
      %v609 = vunpack.c.h.b16 %v234
      %v610 = vunpack.c.l.b16 %v235
      %v611 = vunpack.c.h.b16 %v235
      %v612 = vunpack.c.l.b16 %v236
      %v613 = vunpack.c.h.b16 %v236
      %v614 = vunpack.c.l.b16 %v237
      %v615 = vunpack.c.h.b16 %v237
      %v616 = vunpack.c.l.b16 %v238
      %v617 = vunpack.c.h.b16 %v238
      %v618 = vunpack.c.l.b16 %v239
      %v619 = vunpack.c.h.b16 %v239
      %v620 = vunpack.c.l.b16 %v240
      %v621 = vunpack.c.h.b16 %v240
      %v622 = vunpack.c.l.b16 %v241
      %v623 = vunpack.c.h.b16 %v241
      %v624 = vunpack.c.l.b16 %v242
      %v625 = vunpack.c.h.b16 %v242
      %v626 = vunpack.c.l.b16 %v243
      %v627 = vunpack.c.h.b16 %v243
      %v628 = vpack.c.b16 %v376, %v372
      %v629 = vpack.c.b16 %v377, %v373
      %v630 = vpack.c.b16 %v378, %v374
      %v631 = vpack.c.b16 %v379, %v375
      %v632 = vpack.c.b16 %v384, %v380
      %v633 = vpack.c.b16 %v385, %v381
      %v634 = vpack.c.b16 %v386, %v382
      %v635 = vpack.c.b16 %v387, %v383
      %v636 = vpack.c.b16 %v392, %v388
      %v637 = vpack.c.b16 %v393, %v389
      %v638 = vpack.c.b16 %v394, %v390
      %v639 = vpack.c.b16 %v395, %v391
      %v640 = vpack.c.b16 %v400, %v396
      %v641 = vpack.c.b16 %v401, %v397
      %v642 = vpack.c.b16 %v402, %v398
      %v643 = vpack.c.b16 %v403, %v399
      %v644 = vpack.c.b16 %v408, %v404
      %v645 = vpack.c.b16 %v409, %v405
      %v646 = vpack.c.b16 %v410, %v406
      %v647 = vpack.c.b16 %v411, %v407
      %v648 = vpack.c.b16 %v416, %v412
      %v649 = vpack.c.b16 %v417, %v413
      %v650 = vpack.c.b16 %v418, %v414
      %v651 = vpack.c.b16 %v419, %v415
      %v652 = vpack.c.b16 %v424, %v420
      %v653 = vpack.c.b16 %v425, %v421
      %v654 = vpack.c.b16 %v426, %v422
      %v655 = vpack.c.b16 %v427, %v423
      %v656 = vpack.c.b16 %v432, %v428
      %v657 = vpack.c.b16 %v433, %v429
      %v658 = vpack.c.b16 %v434, %v430
      %v659 = vpack.c.b16 %v435, %v431
      %v660 = vpack.c.b16 %v440, %v436
      %v661 = vpack.c.b16 %v441, %v437
      %v662 = vpack.c.b16 %v442, %v438
      %v663 = vpack.c.b16 %v443, %v439
      %v664 = vpack.c.b16 %v448, %v444
      %v665 = vpack.c.b16 %v449, %v445
      %v666 = vpack.c.b16 %v450, %v446
      %v667 = vpack.c.b16 %v451, %v447
      %v668 = vpack.c.b16 %v456, %v452
      %v669 = vpack.c.b16 %v457, %v453
      %v670 = vpack.c.b16 %v458, %v454
      %v671 = vpack.c.b16 %v459, %v455
      %v672 = vpack.c.b16 %v464, %v460
      %v673 = vpack.c.b16 %v465, %v461
      %v674 = vpack.c.b16 %v466, %v462
      %v675 = vpack.c.b16 %v467, %v463
      %v676 = vpack.c.b16 %v472, %v468
      %v677 = vpack.c.b16 %v473, %v469
      %v678 = vpack.c.b16 %v474, %v470
      %v679 = vpack.c.b16 %v475, %v471
      %v680 = vpack.c.b16 %v480, %v476
      %v681 = vpack.c.b16 %v481, %v477
      %v682 = vpack.c.b16 %v482, %v478
      %v683 = vpack.c.b16 %v483, %v479
      %v684 = vpack.c.b16 %v488, %v484
      %v685 = vpack.c.b16 %v489, %v485
      %v686 = vpack.c.b16 %v490, %v486
      %v687 = vpack.c.b16 %v491, %v487
      %v688 = vpack.c.b16 %v496, %v492
      %v689 = vpack.c.b16 %v497, %v493
      %v690 = vpack.c.b16 %v498, %v494
      %v691 = vpack.c.b16 %v499, %v495
      %v692 = vpack.c.b16 %v504, %v500
      %v693 = vpack.c.b16 %v505, %v501
      %v694 = vpack.c.b16 %v506, %v502
      %v695 = vpack.c.b16 %v507, %v503
      %v696 = vpack.c.b16 %v512, %v508
      %v697 = vpack.c.b16 %v513, %v509
      %v698 = vpack.c.b16 %v514, %v510
      %v699 = vpack.c.b16 %v515, %v511
      %v700 = vpack.c.b16 %v520, %v516
      %v701 = vpack.c.b16 %v521, %v517
      %v702 = vpack.c.b16 %v522, %v518
      %v703 = vpack.c.b16 %v523, %v519
      %v704 = vpack.c.b16 %v528, %v524
      %v705 = vpack.c.b16 %v529, %v525
      %v706 = vpack.c.b16 %v530, %v526
      %v707 = vpack.c.b16 %v531, %v527
      %v708 = vpack.c.b16 %v536, %v532
      %v709 = vpack.c.b16 %v537, %v533
      %v710 = vpack.c.b16 %v538, %v534
      %v711 = vpack.c.b16 %v539, %v535
      %v712 = vpack.c.b16 %v544, %v540
      %v713 = vpack.c.b16 %v545, %v541
      %v714 = vpack.c.b16 %v546, %v542
      %v715 = vpack.c.b16 %v547, %v543
      %v716 = vpack.c.b16 %v552, %v548
      %v717 = vpack.c.b16 %v553, %v549
      %v718 = vpack.c.b16 %v554, %v550
      %v719 = vpack.c.b16 %v555, %v551
      %v720 = vpack.c.b16 %v560, %v556
      %v721 = vpack.c.b16 %v561, %v557
      %v722 = vpack.c.b16 %v562, %v558
      %v723 = vpack.c.b16 %v563, %v559
      %v724 = vpack.c.b16 %v568, %v564
      %v725 = vpack.c.b16 %v569, %v565
      %v726 = vpack.c.b16 %v570, %v566
      %v727 = vpack.c.b16 %v571, %v567
      %v728 = vpack.c.b16 %v576, %v572
      %v729 = vpack.c.b16 %v577, %v573
      %v730 = vpack.c.b16 %v578, %v574
      %v731 = vpack.c.b16 %v579, %v575
      %v732 = vpack.c.b16 %v584, %v580
      %v733 = vpack.c.b16 %v585, %v581
      %v734 = vpack.c.b16 %v586, %v582
      %v735 = vpack.c.b16 %v587, %v583
      %v736 = vpack.c.b16 %v592, %v588
      %v737 = vpack.c.b16 %v593, %v589
      %v738 = vpack.c.b16 %v594, %v590
      %v739 = vpack.c.b16 %v595, %v591
      %v740 = vpack.c.b16 %v600, %v596
      %v741 = vpack.c.b16 %v601, %v597
      %v742 = vpack.c.b16 %v602, %v598
      %v743 = vpack.c.b16 %v603, %v599
      %v744 = vpack.c.b16 %v608, %v604
      %v745 = vpack.c.b16 %v609, %v605
      %v746 = vpack.c.b16 %v610, %v606
      %v747 = vpack.c.b16 %v611, %v607
      %v748 = vpack.c.b16 %v616, %v612
      %v749 = vpack.c.b16 %v617, %v613
      %v750 = vpack.c.b16 %v618, %v614
      %v751 = vpack.c.b16 %v619, %v615
      %v752 = vpack.c.b16 %v624, %v620
      %v753 = vpack.c.b16 %v625, %v621
      %v754 = vpack.c.b16 %v626, %v622
      %v755 = vpack.c.b16 %v627, %v623
      %884 = vmatpush.bf16.msra.mxu0 %v656
      %885 = vmatpush.bf16.msra.mxu0 %v652
      %886 = vmatpush.bf16.msra.mxu0 %v648
      %887 = vmatpush.bf16.msra.mxu0 %v644
      %888 = vmatpush.bf16.msra.mxu0 %v640
      %889 = vmatpush.bf16.msra.mxu0 %v636
      %890 = vmatpush.bf16.msra.mxu0 %v632
      %891 = vmatpush.bf16.msra.mxu0 %v628
      %892 = vmatmul.bf16.gmra.mxu0 %v112
      %v893 = vpop.f32.mrf.mxu0
      %v894 = vadd.f32 0.0, %v893
      %v895 = vpop.f32.mrf.mxu0
      %896 = vdwg.mxu0
      %897 = vmatpush.bf16.msra.mxu0 %v688
      %898 = vmatpush.bf16.msra.mxu0 %v684
      %899 = vmatpush.bf16.msra.mxu0 %v680
      %900 = vmatpush.bf16.msra.mxu0 %v676
      %901 = vmatpush.bf16.msra.mxu0 %v672
      %902 = vmatpush.bf16.msra.mxu0 %v668
      %903 = vmatpush.bf16.msra.mxu0 %v664
      %904 = vmatpush.bf16.msra.mxu0 %v660
      %905 = vmatmul.bf16.gmra.mxu0 %v113
      %v906 = vpop.f32.mrf.mxu0
      %v907 = vadd.f32 %v894, %v906
      %v908 = vpop.f32.mrf.mxu0
      %909 = vdwg.mxu0
      %910 = vmatpush.bf16.msra.mxu0 %v720
      %911 = vmatpush.bf16.msra.mxu0 %v716
      %912 = vmatpush.bf16.msra.mxu0 %v712
      %913 = vmatpush.bf16.msra.mxu0 %v708
      %914 = vmatpush.bf16.msra.mxu0 %v704
      %915 = vmatpush.bf16.msra.mxu0 %v700
      %916 = vmatpush.bf16.msra.mxu0 %v696
      %917 = vmatpush.bf16.msra.mxu0 %v692
      %918 = vmatmul.bf16.gmra.mxu0 %v114
      %v919 = vpop.f32.mrf.mxu0
      %v920 = vadd.f32 %v907, %v919
      %v921 = vpop.f32.mrf.mxu0
      %922 = vdwg.mxu0
      %923 = vmatpush.bf16.msra.mxu0 %v752
      %924 = vmatpush.bf16.msra.mxu0 %v748
      %925 = vmatpush.bf16.msra.mxu0 %v744
      %926 = vmatpush.bf16.msra.mxu0 %v740
      %927 = vmatpush.bf16.msra.mxu0 %v736
      %928 = vmatpush.bf16.msra.mxu0 %v732
      %929 = vmatpush.bf16.msra.mxu0 %v728
      %930 = vmatpush.bf16.msra.mxu0 %v724
      %931 = vmatmul.bf16.gmra.mxu0 %v115
      %v932 = vpop.f32.mrf.mxu0
      %v933 = vadd.f32 %v920, %v932
      %v934 = vpop.f32.mrf.mxu0
      %935 = vdwg.mxu0
      %936 = vmatpush.bf16.msra.mxu0 %v657
      %937 = vmatpush.bf16.msra.mxu0 %v653
      %938 = vmatpush.bf16.msra.mxu0 %v649
      %939 = vmatpush.bf16.msra.mxu0 %v645
      %940 = vmatpush.bf16.msra.mxu0 %v641
      %941 = vmatpush.bf16.msra.mxu0 %v637
      %942 = vmatpush.bf16.msra.mxu0 %v633
      %943 = vmatpush.bf16.msra.mxu0 %v629
      %944 = vmatmul.bf16.gmra.mxu0 %v112
      %v945 = vpop.f32.mrf.mxu0
      %v946 = vadd.f32 0.0, %v945
      %v947 = vpop.f32.mrf.mxu0
      %948 = vdwg.mxu0
      %949 = vmatpush.bf16.msra.mxu0 %v689
      %950 = vmatpush.bf16.msra.mxu0 %v685
      %951 = vmatpush.bf16.msra.mxu0 %v681
      %952 = vmatpush.bf16.msra.mxu0 %v677
      %953 = vmatpush.bf16.msra.mxu0 %v673
      %954 = vmatpush.bf16.msra.mxu0 %v669
      %955 = vmatpush.bf16.msra.mxu0 %v665
      %956 = vmatpush.bf16.msra.mxu0 %v661
      %957 = vmatmul.bf16.gmra.mxu0 %v113
      %v958 = vpop.f32.mrf.mxu0
      %v959 = vadd.f32 %v946, %v958
      %v960 = vpop.f32.mrf.mxu0
      %961 = vdwg.mxu0
      %962 = vmatpush.bf16.msra.mxu0 %v721
      %963 = vmatpush.bf16.msra.mxu0 %v717
      %964 = vmatpush.bf16.msra.mxu0 %v713
      %965 = vmatpush.bf16.msra.mxu0 %v709
      %966 = vmatpush.bf16.msra.mxu0 %v705
      %967 = vmatpush.bf16.msra.mxu0 %v701
      %968 = vmatpush.bf16.msra.mxu0 %v697
      %969 = vmatpush.bf16.msra.mxu0 %v693
      %970 = vmatmul.bf16.gmra.mxu0 %v114
      %v971 = vpop.f32.mrf.mxu0
      %v972 = vadd.f32 %v959, %v971
      %v973 = vpop.f32.mrf.mxu0
      %974 = vdwg.mxu0
      %975 = vmatpush.bf16.msra.mxu0 %v753
      %976 = vmatpush.bf16.msra.mxu0 %v749
      %977 = vmatpush.bf16.msra.mxu0 %v745
      %978 = vmatpush.bf16.msra.mxu0 %v741
      %979 = vmatpush.bf16.msra.mxu0 %v737
      %980 = vmatpush.bf16.msra.mxu0 %v733
      %981 = vmatpush.bf16.msra.mxu0 %v729
      %982 = vmatpush.bf16.msra.mxu0 %v725
      %983 = vmatmul.bf16.gmra.mxu0 %v115
      %v984 = vpop.f32.mrf.mxu0
      %v985 = vadd.f32 %v972, %v984
      %v986 = vpop.f32.mrf.mxu0
      %987 = vdwg.mxu0
      %988 = vmatpush.bf16.msra.mxu0 %v658
      %989 = vmatpush.bf16.msra.mxu0 %v654
      %990 = vmatpush.bf16.msra.mxu0 %v650
      %991 = vmatpush.bf16.msra.mxu0 %v646
      %992 = vmatpush.bf16.msra.mxu0 %v642
      %993 = vmatpush.bf16.msra.mxu0 %v638
      %994 = vmatpush.bf16.msra.mxu0 %v634
      %995 = vmatpush.bf16.msra.mxu0 %v630
      %996 = vmatmul.bf16.gmra.mxu0 %v112
      %v997 = vpop.f32.mrf.mxu0
      %v998 = vadd.f32 0.0, %v997
      %v999 = vpop.f32.mrf.mxu0
      %1000 = vdwg.mxu0
      %1001 = vmatpush.bf16.msra.mxu0 %v690
      %1002 = vmatpush.bf16.msra.mxu0 %v686
      %1003 = vmatpush.bf16.msra.mxu0 %v682
      %1004 = vmatpush.bf16.msra.mxu0 %v678
      %1005 = vmatpush.bf16.msra.mxu0 %v674
      %1006 = vmatpush.bf16.msra.mxu0 %v670
      %1007 = vmatpush.bf16.msra.mxu0 %v666
      %1008 = vmatpush.bf16.msra.mxu0 %v662
      %1009 = vmatmul.bf16.gmra.mxu0 %v113
      %v1010 = vpop.f32.mrf.mxu0
      %v1011 = vadd.f32 %v998, %v1010
      %v1012 = vpop.f32.mrf.mxu0
      %1013 = vdwg.mxu0
      %1014 = vmatpush.bf16.msra.mxu0 %v722
      %1015 = vmatpush.bf16.msra.mxu0 %v718
      %1016 = vmatpush.bf16.msra.mxu0 %v714
      %1017 = vmatpush.bf16.msra.mxu0 %v710
      %1018 = vmatpush.bf16.msra.mxu0 %v706
      %1019 = vmatpush.bf16.msra.mxu0 %v702
      %1020 = vmatpush.bf16.msra.mxu0 %v698
      %1021 = vmatpush.bf16.msra.mxu0 %v694
      %1022 = vmatmul.bf16.gmra.mxu0 %v114
      %v1023 = vpop.f32.mrf.mxu0
      %v1024 = vadd.f32 %v1011, %v1023
      %v1025 = vpop.f32.mrf.mxu0
      %1026 = vdwg.mxu0
      %1027 = vmatpush.bf16.msra.mxu0 %v754
      %1028 = vmatpush.bf16.msra.mxu0 %v750
      %1029 = vmatpush.bf16.msra.mxu0 %v746
      %1030 = vmatpush.bf16.msra.mxu0 %v742
      %1031 = vmatpush.bf16.msra.mxu0 %v738
      %1032 = vmatpush.bf16.msra.mxu0 %v734
      %1033 = vmatpush.bf16.msra.mxu0 %v730
      %1034 = vmatpush.bf16.msra.mxu0 %v726
      %1035 = vmatmul.bf16.gmra.mxu0 %v115
      %v1036 = vpop.f32.mrf.mxu0
      %v1037 = vadd.f32 %v1024, %v1036
      %v1038 = vpop.f32.mrf.mxu0
      %1039 = vdwg.mxu0
      %1040 = vmatpush.bf16.msra.mxu0 %v659
      %1041 = vmatpush.bf16.msra.mxu0 %v655
      %1042 = vmatpush.bf16.msra.mxu0 %v651
      %1043 = vmatpush.bf16.msra.mxu0 %v647
      %1044 = vmatpush.bf16.msra.mxu0 %v643
      %1045 = vmatpush.bf16.msra.mxu0 %v639
      %1046 = vmatpush.bf16.msra.mxu0 %v635
      %1047 = vmatpush.bf16.msra.mxu0 %v631
      %1048 = vmatmul.bf16.gmra.mxu0 %v112
      %v1049 = vpop.f32.mrf.mxu0
      %v1050 = vadd.f32 0.0, %v1049
      %v1051 = vpop.f32.mrf.mxu0
      %1052 = vdwg.mxu0
      %1053 = vmatpush.bf16.msra.mxu0 %v691
      %1054 = vmatpush.bf16.msra.mxu0 %v687
      %1055 = vmatpush.bf16.msra.mxu0 %v683
      %1056 = vmatpush.bf16.msra.mxu0 %v679
      %1057 = vmatpush.bf16.msra.mxu0 %v675
      %1058 = vmatpush.bf16.msra.mxu0 %v671
      %1059 = vmatpush.bf16.msra.mxu0 %v667
      %1060 = vmatpush.bf16.msra.mxu0 %v663
      %1061 = vmatmul.bf16.gmra.mxu0 %v113
      %v1062 = vpop.f32.mrf.mxu0
      %v1063 = vadd.f32 %v1050, %v1062
      %v1064 = vpop.f32.mrf.mxu0
      %1065 = vdwg.mxu0
      %1066 = vmatpush.bf16.msra.mxu0 %v723
      %1067 = vmatpush.bf16.msra.mxu0 %v719
      %1068 = vmatpush.bf16.msra.mxu0 %v715
      %1069 = vmatpush.bf16.msra.mxu0 %v711
      %1070 = vmatpush.bf16.msra.mxu0 %v707
      %1071 = vmatpush.bf16.msra.mxu0 %v703
      %1072 = vmatpush.bf16.msra.mxu0 %v699
      %1073 = vmatpush.bf16.msra.mxu0 %v695
      %1074 = vmatmul.bf16.gmra.mxu0 %v114
      %v1075 = vpop.f32.mrf.mxu0
      %v1076 = vadd.f32 %v1063, %v1075
      %v1077 = vpop.f32.mrf.mxu0
      %1078 = vdwg.mxu0
      %1079 = vmatpush.bf16.msra.mxu0 %v755
      %1080 = vmatpush.bf16.msra.mxu0 %v751
      %1081 = vmatpush.bf16.msra.mxu0 %v747
      %1082 = vmatpush.bf16.msra.mxu0 %v743
      %1083 = vmatpush.bf16.msra.mxu0 %v739
      %1084 = vmatpush.bf16.msra.mxu0 %v735
      %1085 = vmatpush.bf16.msra.mxu0 %v731
      %1086 = vmatpush.bf16.msra.mxu0 %v727
      %1087 = vmatmul.bf16.gmra.mxu0 %v115
      %v1088 = vpop.f32.mrf.mxu0
      %v1089 = vadd.f32 %v1076, %v1088
      %v1090 = vpop.f32.mrf.mxu0
      %1091 = vdwg.mxu0
      %v1096 = vrot.slane %v985, 7
      %v1097 = vrot.slane %v1037, 6
      %v1098 = vrot.slane %v1089, 5
      %vm1099 = vcmask 1040384
      %v1100 = vsel %vm1099, %v933, %v1096
      %vm1101 = vcmask 1042434
      %v1102 = vsel %vm1101, %v1097, %v1098
      %vm1103 = vcmask 1041408
      %v1104 = vsel %vm1103, %v1100, %v1102
      %1106 = vst.msk [vmem:[#allocation2] sm:$0xf] %vm100, %v1104
    $region45: #{tpu_custom_call.1} parent=1 // pred_fallthru
      _
    %v1107 = vld [vmem:[#allocation6] sm:$0xff]
    %v1108 = vld [vmem:[#allocation6 + $0x8] sm:$0xff]
    %v1109 = vld [vmem:[#allocation6 + $0x10] sm:$0xff]
    %v1110 = vld [vmem:[#allocation6 + $0x18] sm:$0xff]
    %v1111 = vpack.c.bf16 %v1107, %v1107
    %v1112 = vpack.c.bf16 %v1108, %v1108
    %v1113 = vpack.c.bf16 %v1109, %v1109
    %v1114 = vpack.c.bf16 %v1110, %v1110
    %v1115 = vld [vmem:[#allocation9] sm:$0xff]
    %v1116 = vld [vmem:[#allocation9 + $0x8] sm:$0xff]
    %v1117 = vld [vmem:[#allocation9 + $0x10] sm:$0xff]
    %v1118 = vld [vmem:[#allocation9 + $0x18] sm:$0xff]
    %v1119 = vld [vmem:[#allocation9 + $0x20] sm:$0xff]
    %v1120 = vld [vmem:[#allocation9 + $0x28] sm:$0xff]
    %v1121 = vld [vmem:[#allocation9 + $0x30] sm:$0xff]
    %v1122 = vld [vmem:[#allocation9 + $0x38] sm:$0xff]
    %v1123 = vld [vmem:[#allocation9 + $0x40] sm:$0xff]
    %v1124 = vld [vmem:[#allocation9 + $0x48] sm:$0xff]
    %v1125 = vld [vmem:[#allocation9 + $0x50] sm:$0xff]
    %v1126 = vld [vmem:[#allocation9 + $0x58] sm:$0xff]
    %v1127 = vld [vmem:[#allocation9 + $0x60] sm:$0xff]
    %v1128 = vld [vmem:[#allocation9 + $0x68] sm:$0xff]
    %v1129 = vld [vmem:[#allocation9 + $0x70] sm:$0xff]
    %v1130 = vld [vmem:[#allocation9 + $0x78] sm:$0xff]
    %v1131 = vld [vmem:[#allocation9 + $0x80] sm:$0xff]
    %v1132 = vld [vmem:[#allocation9 + $0x88] sm:$0xff]
    %v1133 = vld [vmem:[#allocation9 + $0x90] sm:$0xff]
    %v1134 = vld [vmem:[#allocation9 + $0x98] sm:$0xff]
    %v1135 = vld [vmem:[#allocation9 + $0xa0] sm:$0xff]
    %v1136 = vld [vmem:[#allocation9 + $0xa8] sm:$0xff]
    %v1137 = vld [vmem:[#allocation9 + $0xb0] sm:$0xff]
    %v1138 = vld [vmem:[#allocation9 + $0xb8] sm:$0xff]
    %v1139 = vld [vmem:[#allocation9 + $0xc0] sm:$0xff]
    %v1140 = vld [vmem:[#allocation9 + $0xc8] sm:$0xff]
    %v1141 = vld [vmem:[#allocation9 + $0xd0] sm:$0xff]
    %v1142 = vld [vmem:[#allocation9 + $0xd8] sm:$0xff]
    %v1143 = vld [vmem:[#allocation9 + $0xe0] sm:$0xff]
    %v1144 = vld [vmem:[#allocation9 + $0xe8] sm:$0xff]
    %v1145 = vld [vmem:[#allocation9 + $0xf0] sm:$0xff]
    %v1146 = vld [vmem:[#allocation9 + $0xf8] sm:$0xff]
    %v1147 = vld [vmem:[#allocation9 + $0x100] sm:$0xff]
    %v1148 = vld [vmem:[#allocation9 + $0x108] sm:$0xff]
    %v1149 = vld [vmem:[#allocation9 + $0x110] sm:$0xff]
    %v1150 = vld [vmem:[#allocation9 + $0x118] sm:$0xff]
    %v1151 = vld [vmem:[#allocation9 + $0x120] sm:$0xff]
    %v1152 = vld [vmem:[#allocation9 + $0x128] sm:$0xff]
    %v1153 = vld [vmem:[#allocation9 + $0x130] sm:$0xff]
    %v1154 = vld [vmem:[#allocation9 + $0x138] sm:$0xff]
    %v1155 = vld [vmem:[#allocation9 + $0x140] sm:$0xff]
    %v1156 = vld [vmem:[#allocation9 + $0x148] sm:$0xff]
    %v1157 = vld [vmem:[#allocation9 + $0x150] sm:$0xff]
    %v1158 = vld [vmem:[#allocation9 + $0x158] sm:$0xff]
    %v1159 = vld [vmem:[#allocation9 + $0x160] sm:$0xff]
    %v1160 = vld [vmem:[#allocation9 + $0x168] sm:$0xff]
    %v1161 = vld [vmem:[#allocation9 + $0x170] sm:$0xff]
    %v1162 = vld [vmem:[#allocation9 + $0x178] sm:$0xff]
    %v1163 = vld [vmem:[#allocation9 + $0x180] sm:$0xff]
    %v1164 = vld [vmem:[#allocation9 + $0x188] sm:$0xff]
    %v1165 = vld [vmem:[#allocation9 + $0x190] sm:$0xff]
    %v1166 = vld [vmem:[#allocation9 + $0x198] sm:$0xff]
    %v1167 = vld [vmem:[#allocation9 + $0x1a0] sm:$0xff]
    %v1168 = vld [vmem:[#allocation9 + $0x1a8] sm:$0xff]
    %v1169 = vld [vmem:[#allocation9 + $0x1b0] sm:$0xff]
    %v1170 = vld [vmem:[#allocation9 + $0x1b8] sm:$0xff]
    %v1171 = vld [vmem:[#allocation9 + $0x1c0] sm:$0xff]
    %v1172 = vld [vmem:[#allocation9 + $0x1c8] sm:$0xff]
    %v1173 = vld [vmem:[#allocation9 + $0x1d0] sm:$0xff]
    %v1174 = vld [vmem:[#allocation9 + $0x1d8] sm:$0xff]
    %v1175 = vld [vmem:[#allocation9 + $0x1e0] sm:$0xff]
    %v1176 = vld [vmem:[#allocation9 + $0x1e8] sm:$0xff]
    %v1177 = vld [vmem:[#allocation9 + $0x1f0] sm:$0xff]
    %v1178 = vld [vmem:[#allocation9 + $0x1f8] sm:$0xff]
    %v1179 = vld [vmem:[#allocation9 + $0x200] sm:$0xff]
    %v1180 = vld [vmem:[#allocation9 + $0x208] sm:$0xff]
    %v1181 = vld [vmem:[#allocation9 + $0x210] sm:$0xff]
    %v1182 = vld [vmem:[#allocation9 + $0x218] sm:$0xff]
    %v1183 = vld [vmem:[#allocation9 + $0x220] sm:$0xff]
    %v1184 = vld [vmem:[#allocation9 + $0x228] sm:$0xff]
    %v1185 = vld [vmem:[#allocation9 + $0x230] sm:$0xff]
    %v1186 = vld [vmem:[#allocation9 + $0x238] sm:$0xff]
    %v1187 = vld [vmem:[#allocation9 + $0x240] sm:$0xff]
    %v1188 = vld [vmem:[#allocation9 + $0x248] sm:$0xff]
    %v1189 = vld [vmem:[#allocation9 + $0x250] sm:$0xff]
    %v1190 = vld [vmem:[#allocation9 + $0x258] sm:$0xff]
    %v1191 = vld [vmem:[#allocation9 + $0x260] sm:$0xff]
    %v1192 = vld [vmem:[#allocation9 + $0x268] sm:$0xff]
    %v1193 = vld [vmem:[#allocation9 + $0x270] sm:$0xff]
    %v1194 = vld [vmem:[#allocation9 + $0x278] sm:$0xff]
    %v1195 = vld [vmem:[#allocation9 + $0x280] sm:$0xff]
    %v1196 = vld [vmem:[#allocation9 + $0x288] sm:$0xff]
    %v1197 = vld [vmem:[#allocation9 + $0x290] sm:$0xff]
    %v1198 = vld [vmem:[#allocation9 + $0x298] sm:$0xff]
    %v1199 = vld [vmem:[#allocation9 + $0x2a0] sm:$0xff]
    %v1200 = vld [vmem:[#allocation9 + $0x2a8] sm:$0xff]
    %v1201 = vld [vmem:[#allocation9 + $0x2b0] sm:$0xff]
    %v1202 = vld [vmem:[#allocation9 + $0x2b8] sm:$0xff]
    %v1203 = vld [vmem:[#allocation9 + $0x2c0] sm:$0xff]
    %v1204 = vld [vmem:[#allocation9 + $0x2c8] sm:$0xff]
    %v1205 = vld [vmem:[#allocation9 + $0x2d0] sm:$0xff]
    %v1206 = vld [vmem:[#allocation9 + $0x2d8] sm:$0xff]
    %v1207 = vld [vmem:[#allocation9 + $0x2e0] sm:$0xff]
    %v1208 = vld [vmem:[#allocation9 + $0x2e8] sm:$0xff]
    %v1209 = vld [vmem:[#allocation9 + $0x2f0] sm:$0xff]
    %v1210 = vld [vmem:[#allocation9 + $0x2f8] sm:$0xff]
    %v1211 = vld [vmem:[#allocation9 + $0x300] sm:$0xff]
    %v1212 = vld [vmem:[#allocation9 + $0x308] sm:$0xff]
    %v1213 = vld [vmem:[#allocation9 + $0x310] sm:$0xff]
    %v1214 = vld [vmem:[#allocation9 + $0x318] sm:$0xff]
    %v1215 = vld [vmem:[#allocation9 + $0x320] sm:$0xff]
    %v1216 = vld [vmem:[#allocation9 + $0x328] sm:$0xff]
    %v1217 = vld [vmem:[#allocation9 + $0x330] sm:$0xff]
    %v1218 = vld [vmem:[#allocation9 + $0x338] sm:$0xff]
    %v1219 = vld [vmem:[#allocation9 + $0x340] sm:$0xff]
    %v1220 = vld [vmem:[#allocation9 + $0x348] sm:$0xff]
    %v1221 = vld [vmem:[#allocation9 + $0x350] sm:$0xff]
    %v1222 = vld [vmem:[#allocation9 + $0x358] sm:$0xff]
    %v1223 = vld [vmem:[#allocation9 + $0x360] sm:$0xff]
    %v1224 = vld [vmem:[#allocation9 + $0x368] sm:$0xff]
    %v1225 = vld [vmem:[#allocation9 + $0x370] sm:$0xff]
    %v1226 = vld [vmem:[#allocation9 + $0x378] sm:$0xff]
    %v1227 = vld [vmem:[#allocation9 + $0x380] sm:$0xff]
    %v1228 = vld [vmem:[#allocation9 + $0x388] sm:$0xff]
    %v1229 = vld [vmem:[#allocation9 + $0x390] sm:$0xff]
    %v1230 = vld [vmem:[#allocation9 + $0x398] sm:$0xff]
    %v1231 = vld [vmem:[#allocation9 + $0x3a0] sm:$0xff]
    %v1232 = vld [vmem:[#allocation9 + $0x3a8] sm:$0xff]
    %v1233 = vld [vmem:[#allocation9 + $0x3b0] sm:$0xff]
    %v1234 = vld [vmem:[#allocation9 + $0x3b8] sm:$0xff]
    %v1235 = vld [vmem:[#allocation9 + $0x3c0] sm:$0xff]
    %v1236 = vld [vmem:[#allocation9 + $0x3c8] sm:$0xff]
    %v1237 = vld [vmem:[#allocation9 + $0x3d0] sm:$0xff]
    %v1238 = vld [vmem:[#allocation9 + $0x3d8] sm:$0xff]
    %v1239 = vld [vmem:[#allocation9 + $0x3e0] sm:$0xff]
    %v1240 = vld [vmem:[#allocation9 + $0x3e8] sm:$0xff]
    %v1241 = vld [vmem:[#allocation9 + $0x3f0] sm:$0xff]
    %v1242 = vld [vmem:[#allocation9 + $0x3f8] sm:$0xff]
    %v1243 = vld [vmem:[#allocation2] sm:$0xf]
    %v1245 = vperm.slane %v1243, 0
    %v1246 = vperm.slane %v1243, 1
    %v1247 = vperm.slane %v1243, 2
    %v1248 = vperm.slane %v1243, 3
    %v1381 = vunpack.c.l.b16 %v1115
    %v1382 = vunpack.c.h.b16 %v1115
    %v1383 = vunpack.c.l.b16 %v1116
    %v1384 = vunpack.c.h.b16 %v1116
    %v1385 = vunpack.c.l.b16 %v1117
    %v1386 = vunpack.c.h.b16 %v1117
    %v1387 = vunpack.c.l.b16 %v1118
    %v1388 = vunpack.c.h.b16 %v1118
    %v1389 = vunpack.c.l.b16 %v1119
    %v1390 = vunpack.c.h.b16 %v1119
    %v1391 = vunpack.c.l.b16 %v1120
    %v1392 = vunpack.c.h.b16 %v1120
    %v1393 = vunpack.c.l.b16 %v1121
    %v1394 = vunpack.c.h.b16 %v1121
    %v1395 = vunpack.c.l.b16 %v1122
    %v1396 = vunpack.c.h.b16 %v1122
    %v1397 = vunpack.c.l.b16 %v1123
    %v1398 = vunpack.c.h.b16 %v1123
    %v1399 = vunpack.c.l.b16 %v1124
    %v1400 = vunpack.c.h.b16 %v1124
    %v1401 = vunpack.c.l.b16 %v1125
    %v1402 = vunpack.c.h.b16 %v1125
    %v1403 = vunpack.c.l.b16 %v1126
    %v1404 = vunpack.c.h.b16 %v1126
    %v1405 = vunpack.c.l.b16 %v1127
    %v1406 = vunpack.c.h.b16 %v1127
    %v1407 = vunpack.c.l.b16 %v1128
    %v1408 = vunpack.c.h.b16 %v1128
    %v1409 = vunpack.c.l.b16 %v1129
    %v1410 = vunpack.c.h.b16 %v1129
    %v1411 = vunpack.c.l.b16 %v1130
    %v1412 = vunpack.c.h.b16 %v1130
    %v1413 = vunpack.c.l.b16 %v1131
    %v1414 = vunpack.c.h.b16 %v1131
    %v1415 = vunpack.c.l.b16 %v1132
    %v1416 = vunpack.c.h.b16 %v1132
    %v1417 = vunpack.c.l.b16 %v1133
    %v1418 = vunpack.c.h.b16 %v1133
    %v1419 = vunpack.c.l.b16 %v1134
    %v1420 = vunpack.c.h.b16 %v1134
    %v1421 = vunpack.c.l.b16 %v1135
    %v1422 = vunpack.c.h.b16 %v1135
    %v1423 = vunpack.c.l.b16 %v1136
    %v1424 = vunpack.c.h.b16 %v1136
    %v1425 = vunpack.c.l.b16 %v1137
    %v1426 = vunpack.c.h.b16 %v1137
    %v1427 = vunpack.c.l.b16 %v1138
    %v1428 = vunpack.c.h.b16 %v1138
    %v1429 = vunpack.c.l.b16 %v1139
    %v1430 = vunpack.c.h.b16 %v1139
    %v1431 = vunpack.c.l.b16 %v1140
    %v1432 = vunpack.c.h.b16 %v1140
    %v1433 = vunpack.c.l.b16 %v1141
    %v1434 = vunpack.c.h.b16 %v1141
    %v1435 = vunpack.c.l.b16 %v1142
    %v1436 = vunpack.c.h.b16 %v1142
    %v1437 = vunpack.c.l.b16 %v1143
    %v1438 = vunpack.c.h.b16 %v1143
    %v1439 = vunpack.c.l.b16 %v1144
    %v1440 = vunpack.c.h.b16 %v1144
    %v1441 = vunpack.c.l.b16 %v1145
    %v1442 = vunpack.c.h.b16 %v1145
    %v1443 = vunpack.c.l.b16 %v1146
    %v1444 = vunpack.c.h.b16 %v1146
    %v1445 = vunpack.c.l.b16 %v1147
    %v1446 = vunpack.c.h.b16 %v1147
    %v1447 = vunpack.c.l.b16 %v1148
    %v1448 = vunpack.c.h.b16 %v1148
    %v1449 = vunpack.c.l.b16 %v1149
    %v1450 = vunpack.c.h.b16 %v1149
    %v1451 = vunpack.c.l.b16 %v1150
    %v1452 = vunpack.c.h.b16 %v1150
    %v1453 = vunpack.c.l.b16 %v1151
    %v1454 = vunpack.c.h.b16 %v1151
    %v1455 = vunpack.c.l.b16 %v1152
    %v1456 = vunpack.c.h.b16 %v1152
    %v1457 = vunpack.c.l.b16 %v1153
    %v1458 = vunpack.c.h.b16 %v1153
    %v1459 = vunpack.c.l.b16 %v1154
    %v1460 = vunpack.c.h.b16 %v1154
    %v1461 = vunpack.c.l.b16 %v1155
    %v1462 = vunpack.c.h.b16 %v1155
    %v1463 = vunpack.c.l.b16 %v1156
    %v1464 = vunpack.c.h.b16 %v1156
    %v1465 = vunpack.c.l.b16 %v1157
    %v1466 = vunpack.c.h.b16 %v1157
    %v1467 = vunpack.c.l.b16 %v1158
    %v1468 = vunpack.c.h.b16 %v1158
    %v1469 = vunpack.c.l.b16 %v1159
    %v1470 = vunpack.c.h.b16 %v1159
    %v1471 = vunpack.c.l.b16 %v1160
    %v1472 = vunpack.c.h.b16 %v1160
    %v1473 = vunpack.c.l.b16 %v1161
    %v1474 = vunpack.c.h.b16 %v1161
    %v1475 = vunpack.c.l.b16 %v1162
    %v1476 = vunpack.c.h.b16 %v1162
    %v1477 = vunpack.c.l.b16 %v1163
    %v1478 = vunpack.c.h.b16 %v1163
    %v1479 = vunpack.c.l.b16 %v1164
    %v1480 = vunpack.c.h.b16 %v1164
    %v1481 = vunpack.c.l.b16 %v1165
    %v1482 = vunpack.c.h.b16 %v1165
    %v1483 = vunpack.c.l.b16 %v1166
    %v1484 = vunpack.c.h.b16 %v1166
    %v1485 = vunpack.c.l.b16 %v1167
    %v1486 = vunpack.c.h.b16 %v1167
    %v1487 = vunpack.c.l.b16 %v1168
    %v1488 = vunpack.c.h.b16 %v1168
    %v1489 = vunpack.c.l.b16 %v1169
    %v1490 = vunpack.c.h.b16 %v1169
    %v1491 = vunpack.c.l.b16 %v1170
    %v1492 = vunpack.c.h.b16 %v1170
    %v1493 = vunpack.c.l.b16 %v1171
    %v1494 = vunpack.c.h.b16 %v1171
    %v1495 = vunpack.c.l.b16 %v1172
    %v1496 = vunpack.c.h.b16 %v1172
    %v1497 = vunpack.c.l.b16 %v1173
    %v1498 = vunpack.c.h.b16 %v1173
    %v1499 = vunpack.c.l.b16 %v1174
    %v1500 = vunpack.c.h.b16 %v1174
    %v1501 = vunpack.c.l.b16 %v1175
    %v1502 = vunpack.c.h.b16 %v1175
    %v1503 = vunpack.c.l.b16 %v1176
    %v1504 = vunpack.c.h.b16 %v1176
    %v1505 = vunpack.c.l.b16 %v1177
    %v1506 = vunpack.c.h.b16 %v1177
    %v1507 = vunpack.c.l.b16 %v1178
    %v1508 = vunpack.c.h.b16 %v1178
    %v1509 = vunpack.c.l.b16 %v1179
    %v1510 = vunpack.c.h.b16 %v1179
    %v1511 = vunpack.c.l.b16 %v1180
    %v1512 = vunpack.c.h.b16 %v1180
    %v1513 = vunpack.c.l.b16 %v1181
    %v1514 = vunpack.c.h.b16 %v1181
    %v1515 = vunpack.c.l.b16 %v1182
    %v1516 = vunpack.c.h.b16 %v1182
    %v1517 = vunpack.c.l.b16 %v1183
    %v1518 = vunpack.c.h.b16 %v1183
    %v1519 = vunpack.c.l.b16 %v1184
    %v1520 = vunpack.c.h.b16 %v1184
    %v1521 = vunpack.c.l.b16 %v1185
    %v1522 = vunpack.c.h.b16 %v1185
    %v1523 = vunpack.c.l.b16 %v1186
    %v1524 = vunpack.c.h.b16 %v1186
    %v1525 = vunpack.c.l.b16 %v1187
    %v1526 = vunpack.c.h.b16 %v1187
    %v1527 = vunpack.c.l.b16 %v1188
    %v1528 = vunpack.c.h.b16 %v1188
    %v1529 = vunpack.c.l.b16 %v1189
    %v1530 = vunpack.c.h.b16 %v1189
    %v1531 = vunpack.c.l.b16 %v1190
    %v1532 = vunpack.c.h.b16 %v1190
    %v1533 = vunpack.c.l.b16 %v1191
    %v1534 = vunpack.c.h.b16 %v1191
    %v1535 = vunpack.c.l.b16 %v1192
    %v1536 = vunpack.c.h.b16 %v1192
    %v1537 = vunpack.c.l.b16 %v1193
    %v1538 = vunpack.c.h.b16 %v1193
    %v1539 = vunpack.c.l.b16 %v1194
    %v1540 = vunpack.c.h.b16 %v1194
    %v1541 = vunpack.c.l.b16 %v1195
    %v1542 = vunpack.c.h.b16 %v1195
    %v1543 = vunpack.c.l.b16 %v1196
    %v1544 = vunpack.c.h.b16 %v1196
    %v1545 = vunpack.c.l.b16 %v1197
    %v1546 = vunpack.c.h.b16 %v1197
    %v1547 = vunpack.c.l.b16 %v1198
    %v1548 = vunpack.c.h.b16 %v1198
    %v1549 = vunpack.c.l.b16 %v1199
    %v1550 = vunpack.c.h.b16 %v1199
    %v1551 = vunpack.c.l.b16 %v1200
    %v1552 = vunpack.c.h.b16 %v1200
    %v1553 = vunpack.c.l.b16 %v1201
    %v1554 = vunpack.c.h.b16 %v1201
    %v1555 = vunpack.c.l.b16 %v1202
    %v1556 = vunpack.c.h.b16 %v1202
    %v1557 = vunpack.c.l.b16 %v1203
    %v1558 = vunpack.c.h.b16 %v1203
    %v1559 = vunpack.c.l.b16 %v1204
    %v1560 = vunpack.c.h.b16 %v1204
    %v1561 = vunpack.c.l.b16 %v1205
    %v1562 = vunpack.c.h.b16 %v1205
    %v1563 = vunpack.c.l.b16 %v1206
    %v1564 = vunpack.c.h.b16 %v1206
    %v1565 = vunpack.c.l.b16 %v1207
    %v1566 = vunpack.c.h.b16 %v1207
    %v1567 = vunpack.c.l.b16 %v1208
    %v1568 = vunpack.c.h.b16 %v1208
    %v1569 = vunpack.c.l.b16 %v1209
    %v1570 = vunpack.c.h.b16 %v1209
    %v1571 = vunpack.c.l.b16 %v1210
    %v1572 = vunpack.c.h.b16 %v1210
    %v1573 = vunpack.c.l.b16 %v1211
    %v1574 = vunpack.c.h.b16 %v1211
    %v1575 = vunpack.c.l.b16 %v1212
    %v1576 = vunpack.c.h.b16 %v1212
    %v1577 = vunpack.c.l.b16 %v1213
    %v1578 = vunpack.c.h.b16 %v1213
    %v1579 = vunpack.c.l.b16 %v1214
    %v1580 = vunpack.c.h.b16 %v1214
    %v1581 = vunpack.c.l.b16 %v1215
    %v1582 = vunpack.c.h.b16 %v1215
    %v1583 = vunpack.c.l.b16 %v1216
    %v1584 = vunpack.c.h.b16 %v1216
    %v1585 = vunpack.c.l.b16 %v1217
    %v1586 = vunpack.c.h.b16 %v1217
    %v1587 = vunpack.c.l.b16 %v1218
    %v1588 = vunpack.c.h.b16 %v1218
    %v1589 = vunpack.c.l.b16 %v1219
    %v1590 = vunpack.c.h.b16 %v1219
    %v1591 = vunpack.c.l.b16 %v1220
    %v1592 = vunpack.c.h.b16 %v1220
    %v1593 = vunpack.c.l.b16 %v1221
    %v1594 = vunpack.c.h.b16 %v1221
    %v1595 = vunpack.c.l.b16 %v1222
    %v1596 = vunpack.c.h.b16 %v1222
    %v1597 = vunpack.c.l.b16 %v1223
    %v1598 = vunpack.c.h.b16 %v1223
    %v1599 = vunpack.c.l.b16 %v1224
    %v1600 = vunpack.c.h.b16 %v1224
    %v1601 = vunpack.c.l.b16 %v1225
    %v1602 = vunpack.c.h.b16 %v1225
    %v1603 = vunpack.c.l.b16 %v1226
    %v1604 = vunpack.c.h.b16 %v1226
    %v1605 = vunpack.c.l.b16 %v1227
    %v1606 = vunpack.c.h.b16 %v1227
    %v1607 = vunpack.c.l.b16 %v1228
    %v1608 = vunpack.c.h.b16 %v1228
    %v1609 = vunpack.c.l.b16 %v1229
    %v1610 = vunpack.c.h.b16 %v1229
    %v1611 = vunpack.c.l.b16 %v1230
    %v1612 = vunpack.c.h.b16 %v1230
    %v1613 = vunpack.c.l.b16 %v1231
    %v1614 = vunpack.c.h.b16 %v1231
    %v1615 = vunpack.c.l.b16 %v1232
    %v1616 = vunpack.c.h.b16 %v1232
    %v1617 = vunpack.c.l.b16 %v1233
    %v1618 = vunpack.c.h.b16 %v1233
    %v1619 = vunpack.c.l.b16 %v1234
    %v1620 = vunpack.c.h.b16 %v1234
    %v1621 = vunpack.c.l.b16 %v1235
    %v1622 = vunpack.c.h.b16 %v1235
    %v1623 = vunpack.c.l.b16 %v1236
    %v1624 = vunpack.c.h.b16 %v1236
    %v1625 = vunpack.c.l.b16 %v1237
    %v1626 = vunpack.c.h.b16 %v1237
    %v1627 = vunpack.c.l.b16 %v1238
    %v1628 = vunpack.c.h.b16 %v1238
    %v1629 = vunpack.c.l.b16 %v1239
    %v1630 = vunpack.c.h.b16 %v1239
    %v1631 = vunpack.c.l.b16 %v1240
    %v1632 = vunpack.c.h.b16 %v1240
    %v1633 = vunpack.c.l.b16 %v1241
    %v1634 = vunpack.c.h.b16 %v1241
    %v1635 = vunpack.c.l.b16 %v1242
    %v1636 = vunpack.c.h.b16 %v1242
    %v1637 = vpack.c.b16 %v1385, %v1381
    %v1638 = vpack.c.b16 %v1386, %v1382
    %v1639 = vpack.c.b16 %v1387, %v1383
    %v1640 = vpack.c.b16 %v1388, %v1384
    %v1641 = vpack.c.b16 %v1393, %v1389
    %v1642 = vpack.c.b16 %v1394, %v1390
    %v1643 = vpack.c.b16 %v1395, %v1391
    %v1644 = vpack.c.b16 %v1396, %v1392
    %v1645 = vpack.c.b16 %v1401, %v1397
    %v1646 = vpack.c.b16 %v1402, %v1398
    %v1647 = vpack.c.b16 %v1403, %v1399
    %v1648 = vpack.c.b16 %v1404, %v1400
    %v1649 = vpack.c.b16 %v1409, %v1405
    %v1650 = vpack.c.b16 %v1410, %v1406
    %v1651 = vpack.c.b16 %v1411, %v1407
    %v1652 = vpack.c.b16 %v1412, %v1408
    %v1653 = vpack.c.b16 %v1417, %v1413
    %v1654 = vpack.c.b16 %v1418, %v1414
    %v1655 = vpack.c.b16 %v1419, %v1415
    %v1656 = vpack.c.b16 %v1420, %v1416
    %v1657 = vpack.c.b16 %v1425, %v1421
    %v1658 = vpack.c.b16 %v1426, %v1422
    %v1659 = vpack.c.b16 %v1427, %v1423
    %v1660 = vpack.c.b16 %v1428, %v1424
    %v1661 = vpack.c.b16 %v1433, %v1429
    %v1662 = vpack.c.b16 %v1434, %v1430
    %v1663 = vpack.c.b16 %v1435, %v1431
    %v1664 = vpack.c.b16 %v1436, %v1432
    %v1665 = vpack.c.b16 %v1441, %v1437
    %v1666 = vpack.c.b16 %v1442, %v1438
    %v1667 = vpack.c.b16 %v1443, %v1439
    %v1668 = vpack.c.b16 %v1444, %v1440
    %v1669 = vpack.c.b16 %v1449, %v1445
    %v1670 = vpack.c.b16 %v1450, %v1446
    %v1671 = vpack.c.b16 %v1451, %v1447
    %v1672 = vpack.c.b16 %v1452, %v1448
    %v1673 = vpack.c.b16 %v1457, %v1453
    %v1674 = vpack.c.b16 %v1458, %v1454
    %v1675 = vpack.c.b16 %v1459, %v1455
    %v1676 = vpack.c.b16 %v1460, %v1456
    %v1677 = vpack.c.b16 %v1465, %v1461
    %v1678 = vpack.c.b16 %v1466, %v1462
    %v1679 = vpack.c.b16 %v1467, %v1463
    %v1680 = vpack.c.b16 %v1468, %v1464
    %v1681 = vpack.c.b16 %v1473, %v1469
    %v1682 = vpack.c.b16 %v1474, %v1470
    %v1683 = vpack.c.b16 %v1475, %v1471
    %v1684 = vpack.c.b16 %v1476, %v1472
    %v1685 = vpack.c.b16 %v1481, %v1477
    %v1686 = vpack.c.b16 %v1482, %v1478
    %v1687 = vpack.c.b16 %v1483, %v1479
    %v1688 = vpack.c.b16 %v1484, %v1480
    %v1689 = vpack.c.b16 %v1489, %v1485
    %v1690 = vpack.c.b16 %v1490, %v1486
    %v1691 = vpack.c.b16 %v1491, %v1487
    %v1692 = vpack.c.b16 %v1492, %v1488
    %v1693 = vpack.c.b16 %v1497, %v1493
    %v1694 = vpack.c.b16 %v1498, %v1494
    %v1695 = vpack.c.b16 %v1499, %v1495
    %v1696 = vpack.c.b16 %v1500, %v1496
    %v1697 = vpack.c.b16 %v1505, %v1501
    %v1698 = vpack.c.b16 %v1506, %v1502
    %v1699 = vpack.c.b16 %v1507, %v1503
    %v1700 = vpack.c.b16 %v1508, %v1504
    %v1701 = vpack.c.b16 %v1513, %v1509
    %v1702 = vpack.c.b16 %v1514, %v1510
    %v1703 = vpack.c.b16 %v1515, %v1511
    %v1704 = vpack.c.b16 %v1516, %v1512
    %v1705 = vpack.c.b16 %v1521, %v1517
    %v1706 = vpack.c.b16 %v1522, %v1518
    %v1707 = vpack.c.b16 %v1523, %v1519
    %v1708 = vpack.c.b16 %v1524, %v1520
    %v1709 = vpack.c.b16 %v1529, %v1525
    %v1710 = vpack.c.b16 %v1530, %v1526
    %v1711 = vpack.c.b16 %v1531, %v1527
    %v1712 = vpack.c.b16 %v1532, %v1528
    %v1713 = vpack.c.b16 %v1537, %v1533
    %v1714 = vpack.c.b16 %v1538, %v1534
    %v1715 = vpack.c.b16 %v1539, %v1535
    %v1716 = vpack.c.b16 %v1540, %v1536
    %v1717 = vpack.c.b16 %v1545, %v1541
    %v1718 = vpack.c.b16 %v1546, %v1542
    %v1719 = vpack.c.b16 %v1547, %v1543
    %v1720 = vpack.c.b16 %v1548, %v1544
    %v1721 = vpack.c.b16 %v1553, %v1549
    %v1722 = vpack.c.b16 %v1554, %v1550
    %v1723 = vpack.c.b16 %v1555, %v1551
    %v1724 = vpack.c.b16 %v1556, %v1552
    %v1725 = vpack.c.b16 %v1561, %v1557
    %v1726 = vpack.c.b16 %v1562, %v1558
    %v1727 = vpack.c.b16 %v1563, %v1559
    %v1728 = vpack.c.b16 %v1564, %v1560
    %v1729 = vpack.c.b16 %v1569, %v1565
    %v1730 = vpack.c.b16 %v1570, %v1566
    %v1731 = vpack.c.b16 %v1571, %v1567
    %v1732 = vpack.c.b16 %v1572, %v1568
    %v1733 = vpack.c.b16 %v1577, %v1573
    %v1734 = vpack.c.b16 %v1578, %v1574
    %v1735 = vpack.c.b16 %v1579, %v1575
    %v1736 = vpack.c.b16 %v1580, %v1576
    %v1737 = vpack.c.b16 %v1585, %v1581
    %v1738 = vpack.c.b16 %v1586, %v1582
    %v1739 = vpack.c.b16 %v1587, %v1583
    %v1740 = vpack.c.b16 %v1588, %v1584
    %v1741 = vpack.c.b16 %v1593, %v1589
    %v1742 = vpack.c.b16 %v1594, %v1590
    %v1743 = vpack.c.b16 %v1595, %v1591
    %v1744 = vpack.c.b16 %v1596, %v1592
    %v1745 = vpack.c.b16 %v1601, %v1597
    %v1746 = vpack.c.b16 %v1602, %v1598
    %v1747 = vpack.c.b16 %v1603, %v1599
    %v1748 = vpack.c.b16 %v1604, %v1600
    %v1749 = vpack.c.b16 %v1609, %v1605
    %v1750 = vpack.c.b16 %v1610, %v1606
    %v1751 = vpack.c.b16 %v1611, %v1607
    %v1752 = vpack.c.b16 %v1612, %v1608
    %v1753 = vpack.c.b16 %v1617, %v1613
    %v1754 = vpack.c.b16 %v1618, %v1614
    %v1755 = vpack.c.b16 %v1619, %v1615
    %v1756 = vpack.c.b16 %v1620, %v1616
    %v1757 = vpack.c.b16 %v1625, %v1621
    %v1758 = vpack.c.b16 %v1626, %v1622
    %v1759 = vpack.c.b16 %v1627, %v1623
    %v1760 = vpack.c.b16 %v1628, %v1624
    %v1761 = vpack.c.b16 %v1633, %v1629
    %v1762 = vpack.c.b16 %v1634, %v1630
    %v1763 = vpack.c.b16 %v1635, %v1631
    %v1764 = vpack.c.b16 %v1636, %v1632
    %1893 = vmatpush.bf16.msra.mxu0 %v1665
    %1894 = vmatpush.bf16.msra.mxu0 %v1661
    %1895 = vmatpush.bf16.msra.mxu0 %v1657
    %1896 = vmatpush.bf16.msra.mxu0 %v1653
    %1897 = vmatpush.bf16.msra.mxu0 %v1649
    %1898 = vmatpush.bf16.msra.mxu0 %v1645
    %1899 = vmatpush.bf16.msra.mxu0 %v1641
    %1900 = vmatpush.bf16.msra.mxu0 %v1637
    %1901 = vmatmul.bf16.gmra.mxu0 %v1111
    %v1902 = vpop.f32.mrf.mxu0
    %v1903 = vadd.f32 %v1245, %v1902
    %v1904 = vpop.f32.mrf.mxu0
    %1905 = vdwg.mxu0
    %1906 = vmatpush.bf16.msra.mxu0 %v1697
    %1907 = vmatpush.bf16.msra.mxu0 %v1693
    %1908 = vmatpush.bf16.msra.mxu0 %v1689
    %1909 = vmatpush.bf16.msra.mxu0 %v1685
    %1910 = vmatpush.bf16.msra.mxu0 %v1681
    %1911 = vmatpush.bf16.msra.mxu0 %v1677
    %1912 = vmatpush.bf16.msra.mxu0 %v1673
    %1913 = vmatpush.bf16.msra.mxu0 %v1669
    %1914 = vmatmul.bf16.gmra.mxu0 %v1112
    %v1915 = vpop.f32.mrf.mxu0
    %v1916 = vadd.f32 %v1903, %v1915
    %v1917 = vpop.f32.mrf.mxu0
    %1918 = vdwg.mxu0
    %1919 = vmatpush.bf16.msra.mxu0 %v1729
    %1920 = vmatpush.bf16.msra.mxu0 %v1725
    %1921 = vmatpush.bf16.msra.mxu0 %v1721
    %1922 = vmatpush.bf16.msra.mxu0 %v1717
    %1923 = vmatpush.bf16.msra.mxu0 %v1713
    %1924 = vmatpush.bf16.msra.mxu0 %v1709
    %1925 = vmatpush.bf16.msra.mxu0 %v1705
    %1926 = vmatpush.bf16.msra.mxu0 %v1701
    %1927 = vmatmul.bf16.gmra.mxu0 %v1113
    %v1928 = vpop.f32.mrf.mxu0
    %v1929 = vadd.f32 %v1916, %v1928
    %v1930 = vpop.f32.mrf.mxu0
    %1931 = vdwg.mxu0
    %1932 = vmatpush.bf16.msra.mxu0 %v1761
    %1933 = vmatpush.bf16.msra.mxu0 %v1757
    %1934 = vmatpush.bf16.msra.mxu0 %v1753
    %1935 = vmatpush.bf16.msra.mxu0 %v1749
    %1936 = vmatpush.bf16.msra.mxu0 %v1745
    %1937 = vmatpush.bf16.msra.mxu0 %v1741
    %1938 = vmatpush.bf16.msra.mxu0 %v1737
    %1939 = vmatpush.bf16.msra.mxu0 %v1733
    %1940 = vmatmul.bf16.gmra.mxu0 %v1114
    %v1941 = vpop.f32.mrf.mxu0
    %v1942 = vadd.f32 %v1929, %v1941
    %v1943 = vpop.f32.mrf.mxu0
    %1944 = vdwg.mxu0
    %1945 = vmatpush.bf16.msra.mxu0 %v1666
    %1946 = vmatpush.bf16.msra.mxu0 %v1662
    %1947 = vmatpush.bf16.msra.mxu0 %v1658
    %1948 = vmatpush.bf16.msra.mxu0 %v1654
    %1949 = vmatpush.bf16.msra.mxu0 %v1650
    %1950 = vmatpush.bf16.msra.mxu0 %v1646
    %1951 = vmatpush.bf16.msra.mxu0 %v1642
    %1952 = vmatpush.bf16.msra.mxu0 %v1638
    %1953 = vmatmul.bf16.gmra.mxu0 %v1111
    %v1954 = vpop.f32.mrf.mxu0
    %v1955 = vadd.f32 %v1246, %v1954
    %v1956 = vpop.f32.mrf.mxu0
    %1957 = vdwg.mxu0
    %1958 = vmatpush.bf16.msra.mxu0 %v1698
    %1959 = vmatpush.bf16.msra.mxu0 %v1694
    %1960 = vmatpush.bf16.msra.mxu0 %v1690
    %1961 = vmatpush.bf16.msra.mxu0 %v1686
    %1962 = vmatpush.bf16.msra.mxu0 %v1682
    %1963 = vmatpush.bf16.msra.mxu0 %v1678
    %1964 = vmatpush.bf16.msra.mxu0 %v1674
    %1965 = vmatpush.bf16.msra.mxu0 %v1670
    %1966 = vmatmul.bf16.gmra.mxu0 %v1112
    %v1967 = vpop.f32.mrf.mxu0
    %v1968 = vadd.f32 %v1955, %v1967
    %v1969 = vpop.f32.mrf.mxu0
    %1970 = vdwg.mxu0
    %1971 = vmatpush.bf16.msra.mxu0 %v1730
    %1972 = vmatpush.bf16.msra.mxu0 %v1726
    %1973 = vmatpush.bf16.msra.mxu0 %v1722
    %1974 = vmatpush.bf16.msra.mxu0 %v1718
    %1975 = vmatpush.bf16.msra.mxu0 %v1714
    %1976 = vmatpush.bf16.msra.mxu0 %v1710
    %1977 = vmatpush.bf16.msra.mxu0 %v1706
    %1978 = vmatpush.bf16.msra.mxu0 %v1702
    %1979 = vmatmul.bf16.gmra.mxu0 %v1113
    %v1980 = vpop.f32.mrf.mxu0
    %v1981 = vadd.f32 %v1968, %v1980
    %v1982 = vpop.f32.mrf.mxu0
    %1983 = vdwg.mxu0
    %1984 = vmatpush.bf16.msra.mxu0 %v1762
    %1985 = vmatpush.bf16.msra.mxu0 %v1758
    %1986 = vmatpush.bf16.msra.mxu0 %v1754
    %1987 = vmatpush.bf16.msra.mxu0 %v1750
    %1988 = vmatpush.bf16.msra.mxu0 %v1746
    %1989 = vmatpush.bf16.msra.mxu0 %v1742
    %1990 = vmatpush.bf16.msra.mxu0 %v1738
    %1991 = vmatpush.bf16.msra.mxu0 %v1734
    %1992 = vmatmul.bf16.gmra.mxu0 %v1114
    %v1993 = vpop.f32.mrf.mxu0
    %v1994 = vadd.f32 %v1981, %v1993
    %v1995 = vpop.f32.mrf.mxu0
    %1996 = vdwg.mxu0
    %1997 = vmatpush.bf16.msra.mxu0 %v1667
    %1998 = vmatpush.bf16.msra.mxu0 %v1663
    %1999 = vmatpush.bf16.msra.mxu0 %v1659
    %2000 = vmatpush.bf16.msra.mxu0 %v1655
    %2001 = vmatpush.bf16.msra.mxu0 %v1651
    %2002 = vmatpush.bf16.msra.mxu0 %v1647
    %2003 = vmatpush.bf16.msra.mxu0 %v1643
    %2004 = vmatpush.bf16.msra.mxu0 %v1639
    %2005 = vmatmul.bf16.gmra.mxu0 %v1111
    %v2006 = vpop.f32.mrf.mxu0
    %v2007 = vadd.f32 %v1247, %v2006
    %v2008 = vpop.f32.mrf.mxu0
    %2009 = vdwg.mxu0
    %2010 = vmatpush.bf16.msra.mxu0 %v1699
    %2011 = vmatpush.bf16.msra.mxu0 %v1695
    %2012 = vmatpush.bf16.msra.mxu0 %v1691
    %2013 = vmatpush.bf16.msra.mxu0 %v1687
    %2014 = vmatpush.bf16.msra.mxu0 %v1683
    %2015 = vmatpush.bf16.msra.mxu0 %v1679
    %2016 = vmatpush.bf16.msra.mxu0 %v1675
    %2017 = vmatpush.bf16.msra.mxu0 %v1671
    %2018 = vmatmul.bf16.gmra.mxu0 %v1112
    %v2019 = vpop.f32.mrf.mxu0
    %v2020 = vadd.f32 %v2007, %v2019
    %v2021 = vpop.f32.mrf.mxu0
    %2022 = vdwg.mxu0
    %2023 = vmatpush.bf16.msra.mxu0 %v1731
    %2024 = vmatpush.bf16.msra.mxu0 %v1727
    %2025 = vmatpush.bf16.msra.mxu0 %v1723
    %2026 = vmatpush.bf16.msra.mxu0 %v1719
    %2027 = vmatpush.bf16.msra.mxu0 %v1715
    %2028 = vmatpush.bf16.msra.mxu0 %v1711
    %2029 = vmatpush.bf16.msra.mxu0 %v1707
    %2030 = vmatpush.bf16.msra.mxu0 %v1703
    %2031 = vmatmul.bf16.gmra.mxu0 %v1113
    %v2032 = vpop.f32.mrf.mxu0
    %v2033 = vadd.f32 %v2020, %v2032
    %v2034 = vpop.f32.mrf.mxu0
    %2035 = vdwg.mxu0
    %2036 = vmatpush.bf16.msra.mxu0 %v1763
    %2037 = vmatpush.bf16.msra.mxu0 %v1759
    %2038 = vmatpush.bf16.msra.mxu0 %v1755
    %2039 = vmatpush.bf16.msra.mxu0 %v1751
    %2040 = vmatpush.bf16.msra.mxu0 %v1747
    %2041 = vmatpush.bf16.msra.mxu0 %v1743
    %2042 = vmatpush.bf16.msra.mxu0 %v1739
    %2043 = vmatpush.bf16.msra.mxu0 %v1735
    %2044 = vmatmul.bf16.gmra.mxu0 %v1114
    %v2045 = vpop.f32.mrf.mxu0
    %v2046 = vadd.f32 %v2033, %v2045
    %v2047 = vpop.f32.mrf.mxu0
    %2048 = vdwg.mxu0
    %2049 = vmatpush.bf16.msra.mxu0 %v1668
    %2050 = vmatpush.bf16.msra.mxu0 %v1664
    %2051 = vmatpush.bf16.msra.mxu0 %v1660
    %2052 = vmatpush.bf16.msra.mxu0 %v1656
    %2053 = vmatpush.bf16.msra.mxu0 %v1652
    %2054 = vmatpush.bf16.msra.mxu0 %v1648
    %2055 = vmatpush.bf16.msra.mxu0 %v1644
    %2056 = vmatpush.bf16.msra.mxu0 %v1640
    %2057 = vmatmul.bf16.gmra.mxu0 %v1111
    %v2058 = vpop.f32.mrf.mxu0
    %v2059 = vadd.f32 %v1248, %v2058
    %v2060 = vpop.f32.mrf.mxu0
    %2061 = vdwg.mxu0
    %2062 = vmatpush.bf16.msra.mxu0 %v1700
    %2063 = vmatpush.bf16.msra.mxu0 %v1696
    %2064 = vmatpush.bf16.msra.mxu0 %v1692
    %2065 = vmatpush.bf16.msra.mxu0 %v1688
    %2066 = vmatpush.bf16.msra.mxu0 %v1684
    %2067 = vmatpush.bf16.msra.mxu0 %v1680
    %2068 = vmatpush.bf16.msra.mxu0 %v1676
    %2069 = vmatpush.bf16.msra.mxu0 %v1672
    %2070 = vmatmul.bf16.gmra.mxu0 %v1112
    %v2071 = vpop.f32.mrf.mxu0
    %v2072 = vadd.f32 %v2059, %v2071
    %v2073 = vpop.f32.mrf.mxu0
    %2074 = vdwg.mxu0
    %2075 = vmatpush.bf16.msra.mxu0 %v1732
    %2076 = vmatpush.bf16.msra.mxu0 %v1728
    %2077 = vmatpush.bf16.msra.mxu0 %v1724
    %2078 = vmatpush.bf16.msra.mxu0 %v1720
    %2079 = vmatpush.bf16.msra.mxu0 %v1716
    %2080 = vmatpush.bf16.msra.mxu0 %v1712
    %2081 = vmatpush.bf16.msra.mxu0 %v1708
    %2082 = vmatpush.bf16.msra.mxu0 %v1704
    %2083 = vmatmul.bf16.gmra.mxu0 %v1113
    %v2084 = vpop.f32.mrf.mxu0
    %v2085 = vadd.f32 %v2072, %v2084
    %v2086 = vpop.f32.mrf.mxu0
    %2087 = vdwg.mxu0
    %2088 = vmatpush.bf16.msra.mxu0 %v1764
    %2089 = vmatpush.bf16.msra.mxu0 %v1760
    %2090 = vmatpush.bf16.msra.mxu0 %v1756
    %2091 = vmatpush.bf16.msra.mxu0 %v1752
    %2092 = vmatpush.bf16.msra.mxu0 %v1748
    %2093 = vmatpush.bf16.msra.mxu0 %v1744
    %2094 = vmatpush.bf16.msra.mxu0 %v1740
    %2095 = vmatpush.bf16.msra.mxu0 %v1736
    %2096 = vmatmul.bf16.gmra.mxu0 %v1114
    %v2097 = vpop.f32.mrf.mxu0
    %v2098 = vadd.f32 %v2085, %v2097
    %v2099 = vpop.f32.mrf.mxu0
    %2100 = vdwg.mxu0
    %v2101 = vtanh.pop %v1942
    %v2102 = vtanh.pop %v1994
    %v2103 = vtanh.pop %v2046
    %v2104 = vtanh.pop %v2098
    %v2105 = vld [vmem:[#allocation11] sm:$0xf]
    %v2107 = vperm.slane %v2105, 0
    %v2108 = vperm.slane %v2105, 1
    %v2109 = vperm.slane %v2105, 2
    %v2110 = vperm.slane %v2105, 3
    %v2115 = vmul.f32 %v2101, %v2107
    %v2116 = vmul.f32 %v2102, %v2108
    %v2117 = vmul.f32 %v2103, %v2109
    %v2118 = vmul.f32 %v2104, %v2110
    %v2119 = vadd.f32 %v2115, %v2116
    %v2120 = vadd.f32 %v2119, %v2117
    %v2121 = vadd.f32 %v2120, %v2118
    %2122 = vadd.xlane.f32.xlu0 %v2121
    %v2123 = vpop.xlane.xlu0 %2122
    %v2124 = vsub.f32 %v2123, %v2123
    %v2125 = vmul.f32 %v2124, 1.442695
    %v2126 = vpow.pop %v2125
    %v2127 = vadd.f32 %v2126, 0.0
    %v2128 = vrcp.pop %v2127
    %v2129 = vmul.f32 %v2127, %v2128
    %v2130 = vsub.f32 1.0, %v2129
    %v2131 = vmul.f32 %v2128, %v2130
    %v2132 = vadd.f32 %v2128, %v2131
    %vm2133 = vweird.f32 %v2127
    %vm2134 = vweird.f32 %v2128
    %vm2135 = vmor %vm2133, %vm2134
    %v2136 = vsel %vm2135, %v2128, %v2132
    %v2137 = vand.u32 2147483647, %v2127
    %vm2138 = vcmp.eq.f32.partialorder %v2137, 8.507059e+37
    %v2139 = vand.u32 %v2127, 2147483648
    %v2140 = vor.u32 1.1754944e-38, %v2139
    %v2141 = vsel %vm2138, %v2140, %v2136
    %v2142 = vmul.f32 %v2126, %v2141
    %v2143 = vld [vmem:[#allocation12] sm:$0xf]
    %v2144 = vmul.f32 %v2142, %v1107
    %v2145 = vmul.f32 %v2142, %v1108
    %v2146 = vmul.f32 %v2142, %v1109
    %v2147 = vmul.f32 %v2142, %v1110
    %v2148 = vrot.slane %v2144, 4
    %v2149 = vadd.f32 %v2144, %v2148
    %v2150 = vrot.slane %v2149, 2
    %v2151 = vadd.f32 %v2149, %v2150
    %v2152 = vrot.slane %v2151, 1
    %v2153 = vadd.f32 %v2151, %v2152
    %v2154 = vrot.slane %v2145, 4
    %v2155 = vadd.f32 %v2145, %v2154
    %v2156 = vrot.slane %v2155, 2
    %v2157 = vadd.f32 %v2155, %v2156
    %v2158 = vrot.slane %v2157, 1
    %v2159 = vadd.f32 %v2157, %v2158
    %v2160 = vrot.slane %v2146, 4
    %v2161 = vadd.f32 %v2146, %v2160
    %v2162 = vrot.slane %v2161, 2
    %v2163 = vadd.f32 %v2161, %v2162
    %v2164 = vrot.slane %v2163, 1
    %v2165 = vadd.f32 %v2163, %v2164
    %v2166 = vrot.slane %v2147, 4
    %v2167 = vadd.f32 %v2147, %v2166
    %v2168 = vrot.slane %v2167, 2
    %v2169 = vadd.f32 %v2167, %v2168
    %v2170 = vrot.slane %v2169, 1
    %v2171 = vadd.f32 %v2169, %v2170
    %v2176 = vrot.slane %v2159, 7
    %v2177 = vrot.slane %v2165, 6
    %v2178 = vrot.slane %v2171, 5
    %vm2179 = vcmask 1040384
    %v2180 = vsel %vm2179, %v2153, %v2176
    %vm2181 = vcmask 1042434
    %v2182 = vsel %vm2181, %v2177, %v2178
    %vm2183 = vcmask 1041408
    %v2184 = vsel %vm2183, %v2180, %v2182
    %v2186 = vadd.f32 %v2143, %v2184
    %v2187 = vlaneseq
    %vm2188 = vcmp.ge.s32.totalorder %v2187, 0
    %vm2189 = vcmp.lt.s32.totalorder %v2187, 512
    %vm2190 = vmand %vm2188, %vm2189
    %2191 = vst.msk [vmem:[#allocation12] sm:$0xf] %vm2190, %v2186
    // Predicated region
    $region46: #{tpu_custom_call.1} parent=1 // pred_check
      _
    $region47: #{tpu_custom_call.1} parent=1 // pred_check_branch
      %2193 = sbr.rel (0) target = $region49
    $region48: #{tpu_custom_call.1} parent=1 // pred_region
      %2195 = vsyncadd [#allocation5], 0
      %s2197 = sshll.u32 [#allocation12], 4
      %s2198 = int_to_ptr.vmem [resolvable:$true] %s2197
      %s2199 = sshll.u32 %s5, 4
      %s2200 = int_to_ptr.hbm [resolvable:$true] %s2199
      %2202 = dma.vmem_to_hbm [thread:$0]  %s2198, 64, %s2200, [#allocation5]
    $region49: #{tpu_custom_call.1} parent=1 // pred_fallthru
      _
    // Predicated region
    $region50: #{tpu_custom_call.1} parent=1 // pred_check
      _
    $region51: #{tpu_custom_call.1} parent=1 // pred_check_branch
      %2204 = sbr.rel (0) target = $region53
    $region52: #{tpu_custom_call.1} parent=1 // pred_region
      %2206 = dma.done [#allocation5], 64
    $region53: #{tpu_custom_call.1} parent=1 // pred_fallthru
      _
    %2207 = vsyncpa [#allocation4], 1
    %2208 = vsyncpa [#allocation7], 1
    %2209 = vsyncpa [#allocation10], 1
    %2210 = vsyncpa [#allocation5], 1

</llo_original>
